<compile_context>
chip_gen: v7x
topology: tpu7x:2x2x1
jax: 0.10.0
libtpu: 0.0.40
codegen_flags: <defaults>
</compile_context>

<pallas_src>
import jax
import jax.numpy as jnp
import numpy as np
from jax.experimental import pallas as pl
from jax.experimental.pallas import tpu as pltpu


# ----------------------------- fused Pallas kernel ---------------------------


def _full_spec(shape):
    return pl.BlockSpec(shape, lambda i: (0,) * len(shape))


def _sentence_ae_kernel(src_len_ref, trg_len_ref, x_enc_ref, x_dec_ref, perm_ref,
                        enc_wih_ref, enc_whh_ref, enc_b_ref,
                        dec_wih_ref, dec_whh_ref, dec_b_ref,
                        out_w_ref, out_b_ref,
                        hid_ref, logp_ref):
    # x_enc_ref: (T_enc*Bp, Ep)   x_dec_ref: (T_dec*Bp, Ep)   (time-major, flattened)
    # *_wih: (Ep, Hp)  *_whh: (Hp, Hp)  *_b: (1, Hp)
    # out_w: (Hp, Vp)  out_b: (1, Vp)   perm: (Bp, Bp) permutation matrix
    # hid_ref: (Bp, Hp)   logp_ref: (T_dec*Bp, Vp)
    Bp = src_len_ref.shape[0]
    Hp = enc_whh_ref.shape[0]
    T_enc = x_enc_ref.shape[0] // Bp
    T_dec = x_dec_ref.shape[0] // Bp

    src_lens = src_len_ref[...]                       # (Bp, 1) int32
    trg_lens = trg_len_ref[...]                       # (Bp, 1) int32

    # ------------------------------ encoder ---------------------------------
    # Hoisted input projection: one big MXU matmul for all timesteps.
    pre_enc = (jnp.dot(x_enc_ref[...], enc_wih_ref[...],
                       preferred_element_type=jnp.float32) + enc_b_ref[...])
    enc_whh = enc_whh_ref[...]
    h = jnp.zeros((Bp, Hp), jnp.float32)
    for t in range(T_enc):                            # fully unrolled (static, tiny)
        h_new = jnp.tanh(pre_enc[t * Bp:(t + 1) * Bp, :]
                         + jnp.dot(h, enc_whh, preferred_element_type=jnp.float32))
        h = jnp.where(t < src_lens, h_new, h)         # freeze past src length

    # --------- permute hidden by perm_trg (as a permutation-matrix matmul) --
    h0 = jnp.dot(perm_ref[...], h, preferred_element_type=jnp.float32)
    hid_ref[...] = h0                                 # module's returned hidden[0]

    # ------------------------------ decoder ---------------------------------
    pre_dec = (jnp.dot(x_dec_ref[...], dec_wih_ref[...],
                       preferred_element_type=jnp.float32) + dec_b_ref[...])
    dec_whh = dec_whh_ref[...]
    h = h0
    outs = []
    for t in range(T_dec):
        h_new = jnp.tanh(pre_dec[t * Bp:(t + 1) * Bp, :]
                         + jnp.dot(h, dec_whh, preferred_element_type=jnp.float32))
        mask = t < trg_lens
        h = jnp.where(mask, h_new, h)
        # pad_packed_sequence: zeros for t >= trg length
        outs.append(jnp.where(mask, h_new, jnp.zeros_like(h_new)))
    dec_flat = jnp.concatenate(outs, axis=0)          # (T_dec*Bp, Hp)

    # --------------- fused vocab projection + log_softmax -------------------
    z = (jnp.dot(dec_flat, out_w_ref[...], preferred_element_type=jnp.float32)
         + out_b_ref[...])                            # padded V cols carry -1e30 bias
    m = jnp.max(z, axis=-1, keepdims=True)
    lse = jnp.log(jnp.sum(jnp.exp(z - m), axis=-1, keepdims=True)) + m
    logp_ref[...] = z - lse


def _fused_call(src_len, trg_len, x_enc, x_dec, perm_mat,
                enc_wih, enc_whh, enc_b, dec_wih, dec_whh, dec_b, out_w, out_b):
    Bp = src_len.shape[0]
    Hp = enc_whh.shape[0]
    Vp = out_w.shape[1]
    T_dec = x_dec.shape[0] // Bp

    in_arrays = [src_len, trg_len, x_enc, x_dec, perm_mat,
                 enc_wih, enc_whh, enc_b, dec_wih, dec_whh, dec_b, out_w, out_b]
    in_specs = [_full_spec(a.shape) for a in in_arrays]

    hid, logp = pl.pallas_call(
        _sentence_ae_kernel,
        out_shape=(jax.ShapeDtypeStruct((Bp, Hp), jnp.float32),
                   jax.ShapeDtypeStruct((T_dec * Bp, Vp), jnp.float32)),
        grid_spec=pltpu.PrefetchScalarGridSpec(
            num_scalar_prefetch=0,
            grid=(1,),
            in_specs=in_specs,
            out_specs=[_full_spec((Bp, Hp)), _full_spec((T_dec * Bp, Vp))],
        ),
        compiler_params=pltpu.CompilerParams(
            dimension_semantics=("arbitrary",)),
    )(*in_arrays)
    return hid, logp


# ----------------------------- SentenceAE forward ----------------------------


def _round_up(x, m):
    return ((x + m - 1) // m) * m


def sentence_ae_forward(params, input_sequence, trg_sequence, src_length, trg_length):
    # NOTE: lengths are used at *trace time* (this wrapper is not jitted) to
    # bound the recurrence trip counts, mirroring pack/pad_packed_sequence.
    emb = params["embedding"]                          # (V, E)
    B, S_src = input_sequence.shape
    S_trg = trg_sequence.shape[1]
    H = params["enc_Whh"].shape[0]
    E = emb.shape[1]
    V = emb.shape[0]

    Bp = max(8, _round_up(B, 8))                       # sublane-dense batch
    Hp = _round_up(H, 128)                             # lane-dense hidden
    Vp = _round_up(V, 128)                             # lane-dense vocab
    Ep = E                                             # contraction dim, no pad

    T_enc = min(int(np.max(np.asarray(src_length))), S_src)
    T_dec = min(int(np.max(np.asarray(trg_length))), S_trg)

    # ---- sort by src_length (descending); NOTE: stable argsort, ties may
    #      order differently from torch.sort(descending=True) --------------
    perm_src = jnp.argsort(-src_length)
    sorted_src_lengths = src_length[perm_src]
    input_s = input_sequence[perm_src]
    trg_s = trg_sequence[perm_src]

    # ---- sort by (original) trg_length (descending), mirrors PyTorch code --
    perm_trg = jnp.argsort(-trg_length)
    sorted_trg_lengths = trg_length[perm_trg]
    trg_s2 = trg_s[perm_trg]

    # ---- embedding lookups (gathers stay in XLA), time-major, batch-padded --
    x_enc = jnp.transpose(emb[input_s][:, :T_enc, :], (1, 0, 2))   # (T_enc, B, E)
    x_dec = jnp.transpose(emb[trg_s2][:, :T_dec, :], (1, 0, 2))    # (T_dec, B, E)
    x_enc = jnp.pad(x_enc, ((0, 0), (0, Bp - B), (0, 0))).reshape(T_enc * Bp, Ep)
    x_dec = jnp.pad(x_dec, ((0, 0), (0, Bp - B), (0, 0))).reshape(T_dec * Bp, Ep)

    src_len_p = jnp.pad(sorted_src_lengths.astype(jnp.int32), (0, Bp - B)).reshape(Bp, 1)
    trg_len_p = jnp.pad(sorted_trg_lengths.astype(jnp.int32), (0, Bp - B)).reshape(Bp, 1)

    # permutation matrix implementing hidden[perm_trg] (identity on pad rows)
    perm_full = jnp.concatenate([perm_trg.astype(jnp.int32),
                                 jnp.arange(B, Bp, dtype=jnp.int32)])
    perm_mat = jax.nn.one_hot(perm_full, Bp, dtype=jnp.float32)

    # ---- weights: transpose + zero-pad to lane/sublane-dense shapes ---------
    def pad2(w, r, c):
        return jnp.pad(w, ((0, r - w.shape[0]), (0, c - w.shape[1])))

    enc_wih = pad2(params["enc_Wih"].T, Ep, Hp)
    enc_whh = pad2(params["enc_Whh"].T, Hp, Hp)
    enc_b = jnp.pad(params["enc_bih"] + params["enc_bhh"], (0, Hp - H)).reshape(1, Hp)
    dec_wih = pad2(params["dec_Wih"].T, Ep, Hp)
    dec_whh = pad2(params["dec_Whh"].T, Hp, Hp)
    dec_b = jnp.pad(params["dec_bih"] + params["dec_bhh"], (0, Hp - H)).reshape(1, Hp)
    out_w = pad2(params["out_W"].T, Hp, Vp)
    # padded vocab columns get a very negative bias -> ignored by softmax
    out_b = jnp.pad(params["out_b"], (0, Vp - V), constant_values=-1e30).reshape(1, Vp)

    hid_p, logp_p = _fused_call(src_len_p, trg_len_p, x_enc, x_dec, perm_mat,
                                enc_wih, enc_whh, enc_b,
                                dec_wih, dec_whh, dec_b, out_w, out_b)

    # hidden returned by the module: (1, B, H), trg-sorted order
    hidden = hid_p[:B, :H].reshape(1, B, H)

    # logp: (T_dec*Bp, Vp) -> (B, T_dec, V) with both inverse perms folded into
    # one gather (projection/log_softmax commute with the batch permutation).
    logp_tbv = logp_p.reshape(T_dec, Bp, Vp)[:, :B, :V]
    inv_trg = jnp.argsort(perm_trg)
    inv_src = jnp.argsort(perm_src)
    combined = inv_trg[inv_src]                       # x[inv_trg][inv_src]
    logp = jnp.transpose(logp_tbv, (1, 0, 2))[combined]
    return logp, hidden, None, None


# ----------------------------- pure-JAX reference ----------------------------


def _masked_rnn_ref(x_bte, lens, h0, Wih, Whh, b):
    B, T, _ = x_bte.shape
    h = h0
    outs = []
    for t in range(T):
        h_new = jnp.tanh(x_bte[:, t] @ Wih.T + h @ Whh.T + b)
        mask = (t < lens)[:, None]
        h = jnp.where(mask, h_new, h)
        outs.append(jnp.where(mask, h_new, jnp.zeros_like(h_new)))
    return jnp.stack(outs, axis=1), h


def _ref_forward(params, input_sequence, trg_sequence, src_length, trg_length):
    emb = params["embedding"]
    B = input_sequence.shape[0]
    H = params["enc_Whh"].shape[0]
    V = emb.shape[0]

    perm_src = jnp.argsort(-src_length)
    sorted_src_lengths = src_length[perm_src]
    input_s = input_sequence[perm_src]
    trg_s = trg_sequence[perm_src]

    _, h_enc = _masked_rnn_ref(emb[input_s], sorted_src_lengths,
                               jnp.zeros((B, H), jnp.float32),
                               params["enc_Wih"], params["enc_Whh"],
                               params["enc_bih"] + params["enc_bhh"])
    hidden = h_enc.reshape(B, 1, H)

    perm_trg = jnp.argsort(-trg_length)
    sorted_trg_lengths = trg_length[perm_trg]
    trg_s2 = trg_s[perm_trg]
    hidden = hidden[perm_trg]
    hidden = jnp.transpose(hidden, (1, 0, 2))

    dec_out, _ = _masked_rnn_ref(emb[trg_s2], sorted_trg_lengths, hidden[0],
                                 params["dec_Wih"], params["dec_Whh"],
                                 params["dec_bih"] + params["dec_bhh"])

    inv_trg = jnp.argsort(perm_trg)
    inv_src = jnp.argsort(perm_src)
    padded_outputs = dec_out[inv_trg][inv_src]

    b, s, _ = padded_outputs.shape
    z = padded_outputs.reshape(b * s, H) @ params["out_W"].T + params["out_b"]
    logp = jax.nn.log_softmax(z, axis=-1).reshape(b, s, V)
    return logp, hidden


# ------------------------------------ main -----------------------------------


if __name__ == "__main__":
    # small shapes: batch=4, seq=8, embedding=16, hidden=32, vocab=32
    B, S_SRC, S_TRG = 4, 8, 8
    E, H, V = 16, 32, 32

    # deterministic parameters
    pkey = jax.random.PRNGKey(42)
    pk = jax.random.split(pkey, 12)
    init = lambda k, shp: (0.1 * jax.random.normal(k, shp)).astype(jnp.float32)
    params = {
        "embedding": init(pk[0], (V, E)),
        "enc_Wih": init(pk[1], (H, E)), "enc_Whh": init(pk[2], (H, H)),
        "enc_bih": init(pk[3], (H,)),   "enc_bhh": init(pk[4], (H,)),
        "dec_Wih": init(pk[5], (H, E)), "dec_Whh": init(pk[6], (H, H)),
        "dec_bih": init(pk[7], (H,)),   "dec_bhh": init(pk[8], (H,)),
        "out_W": init(pk[9], (V, H)),   "out_b": init(pk[10], (V,)),
    }

    # deterministic example inputs
    ikey = jax.random.PRNGKey(0)
    k1, k2 = jax.random.split(ikey, 2)
    input_sequence = jax.random.randint(k1, (B, S_SRC), 0, V, dtype=jnp.int32)
    trg_sequence = jax.random.randint(k2, (B, S_TRG), 0, V, dtype=jnp.int32)
    src_length = jnp.array([6, 8, 3, 5], dtype=jnp.int32)   # distinct, <= S_SRC
    trg_length = jnp.array([7, 4, 8, 6], dtype=jnp.int32)   # distinct, max == S_TRG

    logp, hidden, _, _ = sentence_ae_forward(
        params, input_sequence, trg_sequence, src_length, trg_length)
    jax.block_until_ready(logp)
    jax.block_until_ready(hidden)

    logp_ref, hidden_ref = _ref_forward(
        params, input_sequence, trg_sequence, src_length, trg_length)

    assert logp.shape == (B, S_TRG, V) and hidden.shape == (1, B, H)
    np.testing.assert_allclose(np.asarray(logp), np.asarray(logp_ref), rtol=2e-3, atol=2e-3)
    np.testing.assert_allclose(np.asarray(hidden), np.asarray(hidden_ref), rtol=2e-3, atol=2e-3)

    print("KERNEL_OK")
</pallas_src>

<mosaic_0001>
module attributes {stable_mosaic.version = 11 : i64} {
  func.func @_sentence_ae_kernel(%arg0: i32, %arg1: memref<8x1xi32, #tpu.memory_space<vmem>>, %arg2: memref<8x1xi32, #tpu.memory_space<vmem>>, %arg3: memref<64x16xf32, #tpu.memory_space<vmem>>, %arg4: memref<64x16xf32, #tpu.memory_space<vmem>>, %arg5: memref<8x8xf32, #tpu.memory_space<vmem>>, %arg6: memref<16x128xf32, #tpu.memory_space<vmem>>, %arg7: memref<128x128xf32, #tpu.memory_space<vmem>>, %arg8: memref<1x128xf32, #tpu.memory_space<vmem>>, %arg9: memref<16x128xf32, #tpu.memory_space<vmem>>, %arg10: memref<128x128xf32, #tpu.memory_space<vmem>>, %arg11: memref<1x128xf32, #tpu.memory_space<vmem>>, %arg12: memref<128x128xf32, #tpu.memory_space<vmem>>, %arg13: memref<1x128xf32, #tpu.memory_space<vmem>>, %arg14: memref<8x128xf32, #tpu.memory_space<vmem>>, %arg15: memref<64x128xf32, #tpu.memory_space<vmem>>) attributes {dimension_semantics = [#tpu.dimension_semantics<arbitrary>], iteration_bounds = array<i64: 1>, scalar_prefetch = 0 : i64, scratch_operands = 0 : i64, tpu.core_type = #tpu.core_type<tc>, window_params = [{pipeline_mode = #tpu.pipeline_mode<synchronous>, transform_indices = @transform_0, window_bounds = array<i64: 8, 1>}, {pipeline_mode = #tpu.pipeline_mode<synchronous>, transform_indices = @transform_1, window_bounds = array<i64: 8, 1>}, {pipeline_mode = #tpu.pipeline_mode<synchronous>, transform_indices = @transform_2, window_bounds = array<i64: 64, 16>}, {pipeline_mode = #tpu.pipeline_mode<synchronous>, transform_indices = @transform_3, window_bounds = array<i64: 64, 16>}, {pipeline_mode = #tpu.pipeline_mode<synchronous>, transform_indices = @transform_4, window_bounds = array<i64: 8, 8>}, {pipeline_mode = #tpu.pipeline_mode<synchronous>, transform_indices = @transform_5, window_bounds = array<i64: 16, 128>}, {pipeline_mode = #tpu.pipeline_mode<synchronous>, transform_indices = @transform_6, window_bounds = array<i64: 128, 128>}, {pipeline_mode = #tpu.pipeline_mode<synchronous>, transform_indices = @transform_7, window_bounds = array<i64: 1, 128>}, {pipeline_mode = #tpu.pipeline_mode<synchronous>, transform_indices = @transform_8, window_bounds = array<i64: 16, 128>}, {pipeline_mode = #tpu.pipeline_mode<synchronous>, transform_indices = @transform_9, window_bounds = array<i64: 128, 128>}, {pipeline_mode = #tpu.pipeline_mode<synchronous>, transform_indices = @transform_10, window_bounds = array<i64: 1, 128>}, {pipeline_mode = #tpu.pipeline_mode<synchronous>, transform_indices = @transform_11, window_bounds = array<i64: 128, 128>}, {pipeline_mode = #tpu.pipeline_mode<synchronous>, transform_indices = @transform_12, window_bounds = array<i64: 1, 128>}, {pipeline_mode = #tpu.pipeline_mode<synchronous>, transform_indices = @transform_13, window_bounds = array<i64: 8, 128>}, {pipeline_mode = #tpu.pipeline_mode<synchronous>, transform_indices = @transform_14, window_bounds = array<i64: 64, 128>}]} {
    %c0 = arith.constant 0 : index
    %c0_0 = arith.constant 0 : index
    %0 = vector.load %arg1[%c0, %c0_0] : memref<8x1xi32, #tpu.memory_space<vmem>>, vector<8x1xi32>
    %c0_1 = arith.constant 0 : index
    %c0_2 = arith.constant 0 : index
    %1 = vector.load %arg2[%c0_1, %c0_2] : memref<8x1xi32, #tpu.memory_space<vmem>>, vector<8x1xi32>
    %c0_3 = arith.constant 0 : index
    %c0_4 = arith.constant 0 : index
    %2 = vector.load %arg3[%c0_3, %c0_4] : memref<64x16xf32, #tpu.memory_space<vmem>>, vector<64x16xf32>
    %c0_5 = arith.constant 0 : index
    %c0_6 = arith.constant 0 : index
    %3 = vector.load %arg6[%c0_5, %c0_6] : memref<16x128xf32, #tpu.memory_space<vmem>>, vector<16x128xf32>
    %cst = arith.constant dense<0.000000e+00> : vector<64x128xf32>
    %4 = tpu.matmul %2, %3, %cst {dimension_numbers = #tpu.dot_dimension_numbers<[1], [0], [0], [1], [0, 0, 1, 1], [], []>} : vector<64x16xf32>, vector<16x128xf32>, vector<64x128xf32> -> vector<64x128xf32>
    %c0_7 = arith.constant 0 : index
    %c0_8 = arith.constant 0 : index
    %5 = vector.load %arg8[%c0_7, %c0_8] : memref<1x128xf32, #tpu.memory_space<vmem>>, vector<1x128xf32>
    %6 = vector.broadcast %5 : vector<1x128xf32> to vector<64x128xf32>
    %7 = arith.addf %4, %6 : vector<64x128xf32>
    %c0_9 = arith.constant 0 : index
    %c0_10 = arith.constant 0 : index
    %8 = vector.load %arg7[%c0_9, %c0_10] : memref<128x128xf32, #tpu.memory_space<vmem>>, vector<128x128xf32>
    %cst_11 = arith.constant 0.000000e+00 : f32
    %9 = vector.broadcast %cst_11 : f32 to vector<8x128xf32>
    %10 = vector.extract_strided_slice %7 {offsets = [0, 0], sizes = [8, 128], strides = [1, 1]} : vector<64x128xf32> to vector<8x128xf32>
    %cst_12 = arith.constant dense<0.000000e+00> : vector<8x128xf32>
    %11 = tpu.matmul %9, %8, %cst_12 {dimension_numbers = #tpu.dot_dimension_numbers<[1], [0], [0], [1], [0, 0, 1, 1], [], []>} : vector<8x128xf32>, vector<128x128xf32>, vector<8x128xf32> -> vector<8x128xf32>
    %12 = arith.addf %10, %11 : vector<8x128xf32>
    %13 = math.tanh %12 : vector<8x128xf32>
    %c0_i32 = arith.constant 0 : i32
    %14 = vector.broadcast %c0_i32 : i32 to vector<8x1xi32>
    %15 = arith.cmpi sgt, %0, %14 : vector<8x1xi32>
    %16 = vector.shape_cast %15 : vector<8x1xi1> to vector<8x1xi1>
    %17 = vector.broadcast %16 : vector<8x1xi1> to vector<8x128xi1>
    %18 = arith.select %17, %13, %9 : vector<8x128xi1>, vector<8x128xf32>
    %19 = vector.extract_strided_slice %7 {offsets = [8, 0], sizes = [8, 128], strides = [1, 1]} : vector<64x128xf32> to vector<8x128xf32>
    %cst_13 = arith.constant dense<0.000000e+00> : vector<8x128xf32>
    %20 = tpu.matmul %18, %8, %cst_13 {dimension_numbers = #tpu.dot_dimension_numbers<[1], [0], [0], [1], [0, 0, 1, 1], [], []>} : vector<8x128xf32>, vector<128x128xf32>, vector<8x128xf32> -> vector<8x128xf32>
    %21 = arith.addf %19, %20 : vector<8x128xf32>
    %22 = math.tanh %21 : vector<8x128xf32>
    %c1_i32 = arith.constant 1 : i32
    %23 = vector.broadcast %c1_i32 : i32 to vector<8x1xi32>
    %24 = arith.cmpi sgt, %0, %23 : vector<8x1xi32>
    %25 = vector.shape_cast %24 : vector<8x1xi1> to vector<8x1xi1>
    %26 = vector.broadcast %25 : vector<8x1xi1> to vector<8x128xi1>
    %27 = arith.select %26, %22, %18 : vector<8x128xi1>, vector<8x128xf32>
    %28 = vector.extract_strided_slice %7 {offsets = [16, 0], sizes = [8, 128], strides = [1, 1]} : vector<64x128xf32> to vector<8x128xf32>
    %cst_14 = arith.constant dense<0.000000e+00> : vector<8x128xf32>
    %29 = tpu.matmul %27, %8, %cst_14 {dimension_numbers = #tpu.dot_dimension_numbers<[1], [0], [0], [1], [0, 0, 1, 1], [], []>} : vector<8x128xf32>, vector<128x128xf32>, vector<8x128xf32> -> vector<8x128xf32>
    %30 = arith.addf %28, %29 : vector<8x128xf32>
    %31 = math.tanh %30 : vector<8x128xf32>
    %c2_i32 = arith.constant 2 : i32
    %32 = vector.broadcast %c2_i32 : i32 to vector<8x1xi32>
    %33 = arith.cmpi sgt, %0, %32 : vector<8x1xi32>
    %34 = vector.shape_cast %33 : vector<8x1xi1> to vector<8x1xi1>
    %35 = vector.broadcast %34 : vector<8x1xi1> to vector<8x128xi1>
    %36 = arith.select %35, %31, %27 : vector<8x128xi1>, vector<8x128xf32>
    %37 = vector.extract_strided_slice %7 {offsets = [24, 0], sizes = [8, 128], strides = [1, 1]} : vector<64x128xf32> to vector<8x128xf32>
    %cst_15 = arith.constant dense<0.000000e+00> : vector<8x128xf32>
    %38 = tpu.matmul %36, %8, %cst_15 {dimension_numbers = #tpu.dot_dimension_numbers<[1], [0], [0], [1], [0, 0, 1, 1], [], []>} : vector<8x128xf32>, vector<128x128xf32>, vector<8x128xf32> -> vector<8x128xf32>
    %39 = arith.addf %37, %38 : vector<8x128xf32>
    %40 = math.tanh %39 : vector<8x128xf32>
    %c3_i32 = arith.constant 3 : i32
    %41 = vector.broadcast %c3_i32 : i32 to vector<8x1xi32>
    %42 = arith.cmpi sgt, %0, %41 : vector<8x1xi32>
    %43 = vector.shape_cast %42 : vector<8x1xi1> to vector<8x1xi1>
    %44 = vector.broadcast %43 : vector<8x1xi1> to vector<8x128xi1>
    %45 = arith.select %44, %40, %36 : vector<8x128xi1>, vector<8x128xf32>
    %46 = vector.extract_strided_slice %7 {offsets = [32, 0], sizes = [8, 128], strides = [1, 1]} : vector<64x128xf32> to vector<8x128xf32>
    %cst_16 = arith.constant dense<0.000000e+00> : vector<8x128xf32>
    %47 = tpu.matmul %45, %8, %cst_16 {dimension_numbers = #tpu.dot_dimension_numbers<[1], [0], [0], [1], [0, 0, 1, 1], [], []>} : vector<8x128xf32>, vector<128x128xf32>, vector<8x128xf32> -> vector<8x128xf32>
    %48 = arith.addf %46, %47 : vector<8x128xf32>
    %49 = math.tanh %48 : vector<8x128xf32>
    %c4_i32 = arith.constant 4 : i32
    %50 = vector.broadcast %c4_i32 : i32 to vector<8x1xi32>
    %51 = arith.cmpi sgt, %0, %50 : vector<8x1xi32>
    %52 = vector.shape_cast %51 : vector<8x1xi1> to vector<8x1xi1>
    %53 = vector.broadcast %52 : vector<8x1xi1> to vector<8x128xi1>
    %54 = arith.select %53, %49, %45 : vector<8x128xi1>, vector<8x128xf32>
    %55 = vector.extract_strided_slice %7 {offsets = [40, 0], sizes = [8, 128], strides = [1, 1]} : vector<64x128xf32> to vector<8x128xf32>
    %cst_17 = arith.constant dense<0.000000e+00> : vector<8x128xf32>
    %56 = tpu.matmul %54, %8, %cst_17 {dimension_numbers = #tpu.dot_dimension_numbers<[1], [0], [0], [1], [0, 0, 1, 1], [], []>} : vector<8x128xf32>, vector<128x128xf32>, vector<8x128xf32> -> vector<8x128xf32>
    %57 = arith.addf %55, %56 : vector<8x128xf32>
    %58 = math.tanh %57 : vector<8x128xf32>
    %c5_i32 = arith.constant 5 : i32
    %59 = vector.broadcast %c5_i32 : i32 to vector<8x1xi32>
    %60 = arith.cmpi sgt, %0, %59 : vector<8x1xi32>
    %61 = vector.shape_cast %60 : vector<8x1xi1> to vector<8x1xi1>
    %62 = vector.broadcast %61 : vector<8x1xi1> to vector<8x128xi1>
    %63 = arith.select %62, %58, %54 : vector<8x128xi1>, vector<8x128xf32>
    %64 = vector.extract_strided_slice %7 {offsets = [48, 0], sizes = [8, 128], strides = [1, 1]} : vector<64x128xf32> to vector<8x128xf32>
    %cst_18 = arith.constant dense<0.000000e+00> : vector<8x128xf32>
    %65 = tpu.matmul %63, %8, %cst_18 {dimension_numbers = #tpu.dot_dimension_numbers<[1], [0], [0], [1], [0, 0, 1, 1], [], []>} : vector<8x128xf32>, vector<128x128xf32>, vector<8x128xf32> -> vector<8x128xf32>
    %66 = arith.addf %64, %65 : vector<8x128xf32>
    %67 = math.tanh %66 : vector<8x128xf32>
    %c6_i32 = arith.constant 6 : i32
    %68 = vector.broadcast %c6_i32 : i32 to vector<8x1xi32>
    %69 = arith.cmpi sgt, %0, %68 : vector<8x1xi32>
    %70 = vector.shape_cast %69 : vector<8x1xi1> to vector<8x1xi1>
    %71 = vector.broadcast %70 : vector<8x1xi1> to vector<8x128xi1>
    %72 = arith.select %71, %67, %63 : vector<8x128xi1>, vector<8x128xf32>
    %73 = vector.extract_strided_slice %7 {offsets = [56, 0], sizes = [8, 128], strides = [1, 1]} : vector<64x128xf32> to vector<8x128xf32>
    %cst_19 = arith.constant dense<0.000000e+00> : vector<8x128xf32>
    %74 = tpu.matmul %72, %8, %cst_19 {dimension_numbers = #tpu.dot_dimension_numbers<[1], [0], [0], [1], [0, 0, 1, 1], [], []>} : vector<8x128xf32>, vector<128x128xf32>, vector<8x128xf32> -> vector<8x128xf32>
    %75 = arith.addf %73, %74 : vector<8x128xf32>
    %76 = math.tanh %75 : vector<8x128xf32>
    %c7_i32 = arith.constant 7 : i32
    %77 = vector.broadcast %c7_i32 : i32 to vector<8x1xi32>
    %78 = arith.cmpi sgt, %0, %77 : vector<8x1xi32>
    %79 = vector.shape_cast %78 : vector<8x1xi1> to vector<8x1xi1>
    %80 = vector.broadcast %79 : vector<8x1xi1> to vector<8x128xi1>
    %81 = arith.select %80, %76, %72 : vector<8x128xi1>, vector<8x128xf32>
    %c0_20 = arith.constant 0 : index
    %c0_21 = arith.constant 0 : index
    %82 = vector.load %arg5[%c0_20, %c0_21] : memref<8x8xf32, #tpu.memory_space<vmem>>, vector<8x8xf32>
    %cst_22 = arith.constant dense<0.000000e+00> : vector<8x128xf32>
    %83 = tpu.matmul %82, %81, %cst_22 {dimension_numbers = #tpu.dot_dimension_numbers<[1], [0], [0], [1], [0, 0, 1, 1], [], []>} : vector<8x8xf32>, vector<8x128xf32>, vector<8x128xf32> -> vector<8x128xf32>
    %c0_23 = arith.constant 0 : index
    %c0_24 = arith.constant 0 : index
    %84 = vector.load %arg14[%c0_23, %c0_24] : memref<8x128xf32, #tpu.memory_space<vmem>>, vector<8x128xf32>
    tpu.vector_store %arg14[%c0_23, %c0_24], %83 {strides = array<i32>} : memref<8x128xf32, #tpu.memory_space<vmem>>, vector<8x128xf32>,
    %c0_25 = arith.constant 0 : index
    %c0_26 = arith.constant 0 : index
    %85 = vector.load %arg4[%c0_25, %c0_26] : memref<64x16xf32, #tpu.memory_space<vmem>>, vector<64x16xf32>
    %c0_27 = arith.constant 0 : index
    %c0_28 = arith.constant 0 : index
    %86 = vector.load %arg9[%c0_27, %c0_28] : memref<16x128xf32, #tpu.memory_space<vmem>>, vector<16x128xf32>
    %cst_29 = arith.constant dense<0.000000e+00> : vector<64x128xf32>
    %87 = tpu.matmul %85, %86, %cst_29 {dimension_numbers = #tpu.dot_dimension_numbers<[1], [0], [0], [1], [0, 0, 1, 1], [], []>} : vector<64x16xf32>, vector<16x128xf32>, vector<64x128xf32> -> vector<64x128xf32>
    %c0_30 = arith.constant 0 : index
    %c0_31 = arith.constant 0 : index
    %88 = vector.load %arg11[%c0_30, %c0_31] : memref<1x128xf32, #tpu.memory_space<vmem>>, vector<1x128xf32>
    %89 = vector.broadcast %88 : vector<1x128xf32> to vector<64x128xf32>
    %90 = arith.addf %87, %89 : vector<64x128xf32>
    %c0_32 = arith.constant 0 : index
    %c0_33 = arith.constant 0 : index
    %91 = vector.load %arg10[%c0_32, %c0_33] : memref<128x128xf32, #tpu.memory_space<vmem>>, vector<128x128xf32>
    %92 = vector.extract_strided_slice %90 {offsets = [0, 0], sizes = [8, 128], strides = [1, 1]} : vector<64x128xf32> to vector<8x128xf32>
    %cst_34 = arith.constant dense<0.000000e+00> : vector<8x128xf32>
    %93 = tpu.matmul %83, %91, %cst_34 {dimension_numbers = #tpu.dot_dimension_numbers<[1], [0], [0], [1], [0, 0, 1, 1], [], []>} : vector<8x128xf32>, vector<128x128xf32>, vector<8x128xf32> -> vector<8x128xf32>
    %94 = arith.addf %92, %93 : vector<8x128xf32>
    %95 = math.tanh %94 : vector<8x128xf32>
    %c0_i32_35 = arith.constant 0 : i32
    %96 = vector.broadcast %c0_i32_35 : i32 to vector<8x1xi32>
    %97 = arith.cmpi sgt, %1, %96 : vector<8x1xi32>
    %98 = vector.shape_cast %97 : vector<8x1xi1> to vector<8x1xi1>
    %99 = vector.broadcast %98 : vector<8x1xi1> to vector<8x128xi1>
    %100 = arith.select %99, %95, %83 : vector<8x128xi1>, vector<8x128xf32>
    %cst_36 = arith.constant 0.000000e+00 : f32
    %101 = vector.broadcast %cst_36 : f32 to vector<8x128xf32>
    %102 = vector.shape_cast %97 : vector<8x1xi1> to vector<8x1xi1>
    %103 = vector.broadcast %102 : vector<8x1xi1> to vector<8x128xi1>
    %104 = arith.select %103, %95, %101 : vector<8x128xi1>, vector<8x128xf32>
    %105 = vector.extract_strided_slice %90 {offsets = [8, 0], sizes = [8, 128], strides = [1, 1]} : vector<64x128xf32> to vector<8x128xf32>
    %cst_37 = arith.constant dense<0.000000e+00> : vector<8x128xf32>
    %106 = tpu.matmul %100, %91, %cst_37 {dimension_numbers = #tpu.dot_dimension_numbers<[1], [0], [0], [1], [0, 0, 1, 1], [], []>} : vector<8x128xf32>, vector<128x128xf32>, vector<8x128xf32> -> vector<8x128xf32>
    %107 = arith.addf %105, %106 : vector<8x128xf32>
    %108 = math.tanh %107 : vector<8x128xf32>
    %c1_i32_38 = arith.constant 1 : i32
    %109 = vector.broadcast %c1_i32_38 : i32 to vector<8x1xi32>
    %110 = arith.cmpi sgt, %1, %109 : vector<8x1xi32>
    %111 = vector.shape_cast %110 : vector<8x1xi1> to vector<8x1xi1>
    %112 = vector.broadcast %111 : vector<8x1xi1> to vector<8x128xi1>
    %113 = arith.select %112, %108, %100 : vector<8x128xi1>, vector<8x128xf32>
    %cst_39 = arith.constant 0.000000e+00 : f32
    %114 = vector.broadcast %cst_39 : f32 to vector<8x128xf32>
    %115 = vector.shape_cast %110 : vector<8x1xi1> to vector<8x1xi1>
    %116 = vector.broadcast %115 : vector<8x1xi1> to vector<8x128xi1>
    %117 = arith.select %116, %108, %114 : vector<8x128xi1>, vector<8x128xf32>
    %118 = vector.extract_strided_slice %90 {offsets = [16, 0], sizes = [8, 128], strides = [1, 1]} : vector<64x128xf32> to vector<8x128xf32>
    %cst_40 = arith.constant dense<0.000000e+00> : vector<8x128xf32>
    %119 = tpu.matmul %113, %91, %cst_40 {dimension_numbers = #tpu.dot_dimension_numbers<[1], [0], [0], [1], [0, 0, 1, 1], [], []>} : vector<8x128xf32>, vector<128x128xf32>, vector<8x128xf32> -> vector<8x128xf32>
    %120 = arith.addf %118, %119 : vector<8x128xf32>
    %121 = math.tanh %120 : vector<8x128xf32>
    %c2_i32_41 = arith.constant 2 : i32
    %122 = vector.broadcast %c2_i32_41 : i32 to vector<8x1xi32>
    %123 = arith.cmpi sgt, %1, %122 : vector<8x1xi32>
    %124 = vector.shape_cast %123 : vector<8x1xi1> to vector<8x1xi1>
    %125 = vector.broadcast %124 : vector<8x1xi1> to vector<8x128xi1>
    %126 = arith.select %125, %121, %113 : vector<8x128xi1>, vector<8x128xf32>
    %cst_42 = arith.constant 0.000000e+00 : f32
    %127 = vector.broadcast %cst_42 : f32 to vector<8x128xf32>
    %128 = vector.shape_cast %123 : vector<8x1xi1> to vector<8x1xi1>
    %129 = vector.broadcast %128 : vector<8x1xi1> to vector<8x128xi1>
    %130 = arith.select %129, %121, %127 : vector<8x128xi1>, vector<8x128xf32>
    %131 = vector.extract_strided_slice %90 {offsets = [24, 0], sizes = [8, 128], strides = [1, 1]} : vector<64x128xf32> to vector<8x128xf32>
    %cst_43 = arith.constant dense<0.000000e+00> : vector<8x128xf32>
    %132 = tpu.matmul %126, %91, %cst_43 {dimension_numbers = #tpu.dot_dimension_numbers<[1], [0], [0], [1], [0, 0, 1, 1], [], []>} : vector<8x128xf32>, vector<128x128xf32>, vector<8x128xf32> -> vector<8x128xf32>
    %133 = arith.addf %131, %132 : vector<8x128xf32>
    %134 = math.tanh %133 : vector<8x128xf32>
    %c3_i32_44 = arith.constant 3 : i32
    %135 = vector.broadcast %c3_i32_44 : i32 to vector<8x1xi32>
    %136 = arith.cmpi sgt, %1, %135 : vector<8x1xi32>
    %137 = vector.shape_cast %136 : vector<8x1xi1> to vector<8x1xi1>
    %138 = vector.broadcast %137 : vector<8x1xi1> to vector<8x128xi1>
    %139 = arith.select %138, %134, %126 : vector<8x128xi1>, vector<8x128xf32>
    %cst_45 = arith.constant 0.000000e+00 : f32
    %140 = vector.broadcast %cst_45 : f32 to vector<8x128xf32>
    %141 = vector.shape_cast %136 : vector<8x1xi1> to vector<8x1xi1>
    %142 = vector.broadcast %141 : vector<8x1xi1> to vector<8x128xi1>
    %143 = arith.select %142, %134, %140 : vector<8x128xi1>, vector<8x128xf32>
    %144 = vector.extract_strided_slice %90 {offsets = [32, 0], sizes = [8, 128], strides = [1, 1]} : vector<64x128xf32> to vector<8x128xf32>
    %cst_46 = arith.constant dense<0.000000e+00> : vector<8x128xf32>
    %145 = tpu.matmul %139, %91, %cst_46 {dimension_numbers = #tpu.dot_dimension_numbers<[1], [0], [0], [1], [0, 0, 1, 1], [], []>} : vector<8x128xf32>, vector<128x128xf32>, vector<8x128xf32> -> vector<8x128xf32>
    %146 = arith.addf %144, %145 : vector<8x128xf32>
    %147 = math.tanh %146 : vector<8x128xf32>
    %c4_i32_47 = arith.constant 4 : i32
    %148 = vector.broadcast %c4_i32_47 : i32 to vector<8x1xi32>
    %149 = arith.cmpi sgt, %1, %148 : vector<8x1xi32>
    %150 = vector.shape_cast %149 : vector<8x1xi1> to vector<8x1xi1>
    %151 = vector.broadcast %150 : vector<8x1xi1> to vector<8x128xi1>
    %152 = arith.select %151, %147, %139 : vector<8x128xi1>, vector<8x128xf32>
    %cst_48 = arith.constant 0.000000e+00 : f32
    %153 = vector.broadcast %cst_48 : f32 to vector<8x128xf32>
    %154 = vector.shape_cast %149 : vector<8x1xi1> to vector<8x1xi1>
    %155 = vector.broadcast %154 : vector<8x1xi1> to vector<8x128xi1>
    %156 = arith.select %155, %147, %153 : vector<8x128xi1>, vector<8x128xf32>
    %157 = vector.extract_strided_slice %90 {offsets = [40, 0], sizes = [8, 128], strides = [1, 1]} : vector<64x128xf32> to vector<8x128xf32>
    %cst_49 = arith.constant dense<0.000000e+00> : vector<8x128xf32>
    %158 = tpu.matmul %152, %91, %cst_49 {dimension_numbers = #tpu.dot_dimension_numbers<[1], [0], [0], [1], [0, 0, 1, 1], [], []>} : vector<8x128xf32>, vector<128x128xf32>, vector<8x128xf32> -> vector<8x128xf32>
    %159 = arith.addf %157, %158 : vector<8x128xf32>
    %160 = math.tanh %159 : vector<8x128xf32>
    %c5_i32_50 = arith.constant 5 : i32
    %161 = vector.broadcast %c5_i32_50 : i32 to vector<8x1xi32>
    %162 = arith.cmpi sgt, %1, %161 : vector<8x1xi32>
    %163 = vector.shape_cast %162 : vector<8x1xi1> to vector<8x1xi1>
    %164 = vector.broadcast %163 : vector<8x1xi1> to vector<8x128xi1>
    %165 = arith.select %164, %160, %152 : vector<8x128xi1>, vector<8x128xf32>
    %cst_51 = arith.constant 0.000000e+00 : f32
    %166 = vector.broadcast %cst_51 : f32 to vector<8x128xf32>
    %167 = vector.shape_cast %162 : vector<8x1xi1> to vector<8x1xi1>
    %168 = vector.broadcast %167 : vector<8x1xi1> to vector<8x128xi1>
    %169 = arith.select %168, %160, %166 : vector<8x128xi1>, vector<8x128xf32>
    %170 = vector.extract_strided_slice %90 {offsets = [48, 0], sizes = [8, 128], strides = [1, 1]} : vector<64x128xf32> to vector<8x128xf32>
    %cst_52 = arith.constant dense<0.000000e+00> : vector<8x128xf32>
    %171 = tpu.matmul %165, %91, %cst_52 {dimension_numbers = #tpu.dot_dimension_numbers<[1], [0], [0], [1], [0, 0, 1, 1], [], []>} : vector<8x128xf32>, vector<128x128xf32>, vector<8x128xf32> -> vector<8x128xf32>
    %172 = arith.addf %170, %171 : vector<8x128xf32>
    %173 = math.tanh %172 : vector<8x128xf32>
    %c6_i32_53 = arith.constant 6 : i32
    %174 = vector.broadcast %c6_i32_53 : i32 to vector<8x1xi32>
    %175 = arith.cmpi sgt, %1, %174 : vector<8x1xi32>
    %176 = vector.shape_cast %175 : vector<8x1xi1> to vector<8x1xi1>
    %177 = vector.broadcast %176 : vector<8x1xi1> to vector<8x128xi1>
    %178 = arith.select %177, %173, %165 : vector<8x128xi1>, vector<8x128xf32>
    %cst_54 = arith.constant 0.000000e+00 : f32
    %179 = vector.broadcast %cst_54 : f32 to vector<8x128xf32>
    %180 = vector.shape_cast %175 : vector<8x1xi1> to vector<8x1xi1>
    %181 = vector.broadcast %180 : vector<8x1xi1> to vector<8x128xi1>
    %182 = arith.select %181, %173, %179 : vector<8x128xi1>, vector<8x128xf32>
    %183 = vector.extract_strided_slice %90 {offsets = [56, 0], sizes = [8, 128], strides = [1, 1]} : vector<64x128xf32> to vector<8x128xf32>
    %cst_55 = arith.constant dense<0.000000e+00> : vector<8x128xf32>
    %184 = tpu.matmul %178, %91, %cst_55 {dimension_numbers = #tpu.dot_dimension_numbers<[1], [0], [0], [1], [0, 0, 1, 1], [], []>} : vector<8x128xf32>, vector<128x128xf32>, vector<8x128xf32> -> vector<8x128xf32>
    %185 = arith.addf %183, %184 : vector<8x128xf32>
    %186 = math.tanh %185 : vector<8x128xf32>
    %c7_i32_56 = arith.constant 7 : i32
    %187 = vector.broadcast %c7_i32_56 : i32 to vector<8x1xi32>
    %188 = arith.cmpi sgt, %1, %187 : vector<8x1xi32>
    %cst_57 = arith.constant 0.000000e+00 : f32
    %189 = vector.broadcast %cst_57 : f32 to vector<8x128xf32>
    %190 = vector.shape_cast %188 : vector<8x1xi1> to vector<8x1xi1>
    %191 = vector.broadcast %190 : vector<8x1xi1> to vector<8x128xi1>
    %192 = arith.select %191, %186, %189 : vector<8x128xi1>, vector<8x128xf32>
    %193 = tpu.concatenate %104, %117, %130, %143, %156, %169, %182, %192 in 0 : vector<8x128xf32>, vector<8x128xf32>, vector<8x128xf32>, vector<8x128xf32>, vector<8x128xf32>, vector<8x128xf32>, vector<8x128xf32>, vector<8x128xf32> -> vector<64x128xf32>
    %c0_58 = arith.constant 0 : index
    %c0_59 = arith.constant 0 : index
    %194 = vector.load %arg12[%c0_58, %c0_59] : memref<128x128xf32, #tpu.memory_space<vmem>>, vector<128x128xf32>
    %cst_60 = arith.constant dense<0.000000e+00> : vector<64x128xf32>
    %195 = tpu.matmul %193, %194, %cst_60 {dimension_numbers = #tpu.dot_dimension_numbers<[1], [0], [0], [1], [0, 0, 1, 1], [], []>} : vector<64x128xf32>, vector<128x128xf32>, vector<64x128xf32> -> vector<64x128xf32>
    %c0_61 = arith.constant 0 : index
    %c0_62 = arith.constant 0 : index
    %196 = vector.load %arg13[%c0_61, %c0_62] : memref<1x128xf32, #tpu.memory_space<vmem>>, vector<1x128xf32>
    %197 = vector.broadcast %196 : vector<1x128xf32> to vector<64x128xf32>
    %198 = arith.addf %195, %197 : vector<64x128xf32>
    %cst_63 = arith.constant dense<0xFF800000> : vector<64xf32>
    %199 = vector.multi_reduction <maximumf>, %198, %cst_63 [1] : vector<64x128xf32> to vector<64xf32>
    %200 = vector.shape_cast %199 : vector<64xf32> to vector<64x1xf32>
    %201 = vector.broadcast %200 : vector<64x1xf32> to vector<64x128xf32>
    %202 = arith.subf %198, %201 : vector<64x128xf32>
    %203 = math.exp %202 : vector<64x128xf32>
    %cst_64 = arith.constant dense<0.000000e+00> : vector<64xf32>
    %204 = vector.multi_reduction <add>, %203, %cst_64 [1] : vector<64x128xf32> to vector<64xf32>
    %205 = vector.shape_cast %204 : vector<64xf32> to vector<64x1xf32>
    %206 = math.log %205 : vector<64x1xf32>
    %207 = arith.addf %206, %200 : vector<64x1xf32>
    %208 = vector.broadcast %207 : vector<64x1xf32> to vector<64x128xf32>
    %209 = arith.subf %198, %208 : vector<64x128xf32>
    %c0_65 = arith.constant 0 : index
    %c0_66 = arith.constant 0 : index
    %210 = vector.load %arg15[%c0_65, %c0_66] : memref<64x128xf32, #tpu.memory_space<vmem>>, vector<64x128xf32>
    tpu.vector_store %arg15[%c0_65, %c0_66], %209 {strides = array<i32>} : memref<64x128xf32, #tpu.memory_space<vmem>>, vector<64x128xf32>,
    return
  }
  func.func @transform_0(%arg0: i32) -> (i32, i32) {
    %c0_i32 = arith.constant 0 : i32
    %c0_i32_0 = arith.constant 0 : i32
    %c0_i32_1 = arith.constant 0 : i32
    return %c0_i32, %c0_i32_0 : i32, i32
  }
  func.func @transform_1(%arg0: i32) -> (i32, i32) {
    %c0_i32 = arith.constant 0 : i32
    %c0_i32_0 = arith.constant 0 : i32
    %c0_i32_1 = arith.constant 0 : i32
    return %c0_i32, %c0_i32_0 : i32, i32
  }
  func.func @transform_2(%arg0: i32) -> (i32, i32) {
    %c0_i32 = arith.constant 0 : i32
    %c0_i32_0 = arith.constant 0 : i32
    %c0_i32_1 = arith.constant 0 : i32
    return %c0_i32, %c0_i32_0 : i32, i32
  }
  func.func @transform_3(%arg0: i32) -> (i32, i32) {
    %c0_i32 = arith.constant 0 : i32
    %c0_i32_0 = arith.constant 0 : i32
    %c0_i32_1 = arith.constant 0 : i32
    return %c0_i32, %c0_i32_0 : i32, i32
  }
  func.func @transform_4(%arg0: i32) -> (i32, i32) {
    %c0_i32 = arith.constant 0 : i32
    %c0_i32_0 = arith.constant 0 : i32
    %c0_i32_1 = arith.constant 0 : i32
    return %c0_i32, %c0_i32_0 : i32, i32
  }
  func.func @transform_5(%arg0: i32) -> (i32, i32) {
    %c0_i32 = arith.constant 0 : i32
    %c0_i32_0 = arith.constant 0 : i32
    %c0_i32_1 = arith.constant 0 : i32
    return %c0_i32, %c0_i32_0 : i32, i32
  }
  func.func @transform_6(%arg0: i32) -> (i32, i32) {
    %c0_i32 = arith.constant 0 : i32
    %c0_i32_0 = arith.constant 0 : i32
    %c0_i32_1 = arith.constant 0 : i32
    return %c0_i32, %c0_i32_0 : i32, i32
  }
  func.func @transform_7(%arg0: i32) -> (i32, i32) {
    %c0_i32 = arith.constant 0 : i32
    %c0_i32_0 = arith.constant 0 : i32
    %c0_i32_1 = arith.constant 0 : i32
    return %c0_i32, %c0_i32_0 : i32, i32
  }
  func.func @transform_8(%arg0: i32) -> (i32, i32) {
    %c0_i32 = arith.constant 0 : i32
    %c0_i32_0 = arith.constant 0 : i32
    %c0_i32_1 = arith.constant 0 : i32
    return %c0_i32, %c0_i32_0 : i32, i32
  }
  func.func @transform_9(%arg0: i32) -> (i32, i32) {
    %c0_i32 = arith.constant 0 : i32
    %c0_i32_0 = arith.constant 0 : i32
    %c0_i32_1 = arith.constant 0 : i32
    return %c0_i32, %c0_i32_0 : i32, i32
  }
  func.func @transform_10(%arg0: i32) -> (i32, i32) {
    %c0_i32 = arith.constant 0 : i32
    %c0_i32_0 = arith.constant 0 : i32
    %c0_i32_1 = arith.constant 0 : i32
    return %c0_i32, %c0_i32_0 : i32, i32
  }
  func.func @transform_11(%arg0: i32) -> (i32, i32) {
    %c0_i32 = arith.constant 0 : i32
    %c0_i32_0 = arith.constant 0 : i32
    %c0_i32_1 = arith.constant 0 : i32
    return %c0_i32, %c0_i32_0 : i32, i32
  }
  func.func @transform_12(%arg0: i32) -> (i32, i32) {
    %c0_i32 = arith.constant 0 : i32
    %c0_i32_0 = arith.constant 0 : i32
    %c0_i32_1 = arith.constant 0 : i32
    return %c0_i32, %c0_i32_0 : i32, i32
  }
  func.func @transform_13(%arg0: i32) -> (i32, i32) {
    %c0_i32 = arith.constant 0 : i32
    %c0_i32_0 = arith.constant 0 : i32
    %c0_i32_1 = arith.constant 0 : i32
    return %c0_i32, %c0_i32_0 : i32, i32
  }
  func.func @transform_14(%arg0: i32) -> (i32, i32) {
    %c0_i32 = arith.constant 0 : i32
    %c0_i32_0 = arith.constant 0 : i32
    %c0_i32_1 = arith.constant 0 : i32
    return %c0_i32, %c0_i32_0 : i32, i32
  }
}

</mosaic_0001>

<llo_original>
// kernel: tpu_custom_call.1
$region0: #{tpu_custom_call.1}
  #allocation0 [shape = 'u32[]', space=smem, size = 0x4, offset = 0x4, fixed_abs, tag = 'smem constant byte address 0x4 - core index']
  #allocation1 [shape = 'u32[144,128]{1,0:T(1,128)}', space=vmem, size = 0x12000, scoped, tag = 'internal scratch']
  %s0 = inlined_call_operand.vmem [shape: s32[8,1], index: 0, kind: input, shape index: {}]
  %s1 = inlined_call_operand.vmem [shape: s32[8,1], index: 1, kind: input, shape index: {}]
  %s2 = inlined_call_operand.vmem [shape: f32[64,16], index: 2, kind: input, shape index: {}]
  %s3 = inlined_call_operand.vmem [shape: f32[64,16], index: 3, kind: input, shape index: {}]
  %s4 = inlined_call_operand.vmem [shape: f32[8,8], index: 4, kind: input, shape index: {}]
  %s5 = inlined_call_operand.vmem [shape: f32[16,128], index: 5, kind: input, shape index: {}]
  %s6 = inlined_call_operand.vmem [shape: f32[128,128], index: 6, kind: input, shape index: {}]
  %s7 = inlined_call_operand.vmem [shape: f32[1,128], index: 7, kind: input, shape index: {}]
  %s8 = inlined_call_operand.vmem [shape: f32[16,128], index: 8, kind: input, shape index: {}]
  %s9 = inlined_call_operand.hbm [shape: f32[128,128], index: 9, kind: input, shape index: {}]
  %s10 = inlined_call_operand.vmem [shape: f32[1,128], index: 10, kind: input, shape index: {}]
  %s11 = inlined_call_operand.hbm [shape: f32[128,128], index: 11, kind: input, shape index: {}]
  %s12 = inlined_call_operand.vmem [shape: f32[1,128], index: 12, kind: input, shape index: {}]
  %s13 = inlined_call_operand.hbm [shape: f32[8,128], index: 13, kind: output, shape index: {0}]
  %s14 = inlined_call_operand.hbm [shape: f32[64,128], index: 14, kind: output, shape index: {1}]
  %15 = xla_tuple %s13, %s14
  %s16 = sld [smem:[#allocation0]]
  $region78: #{tpu_custom_call.1} parent=0
    _
  %s18 = ssub.s32 1, %s16
  %s19 = scalar_select 0, %s18, %s16
  $region1: #{tpu_custom_call.1} parent=0
    #allocation2 [shape = 'u8[65536]{0}', space=vmem, size = 0x10000, scoped, tag = 'input window, operand 9, single buffered']
    #allocation3 [shape = 's32[1]{0}', space=sflag, size = 0x4, scoped, tag = 'scoped memory for tpu_custom_call.1']
    #allocation4 [shape = 's32[1]{0}', space=sflag, size = 0x4, scoped, tag = 'scoped memory for tpu_custom_call.1']
    #allocation5 [shape = 'u8[65536]{0}', space=vmem, size = 0x10000, scoped, tag = 'input window, operand 11, single buffered']
    #allocation6 [shape = 's32[1]{0}', space=sflag, size = 0x4, scoped, tag = 'scoped memory for tpu_custom_call.1']
    #allocation7 [shape = 'u8[4096]{0}', space=vmem, size = 0x1000, scoped, tag = 'output window, operand 0, single buffered']
    #allocation8 [shape = 'u8[32768]{0}', space=vmem, size = 0x8000, scoped, tag = 'output window, operand 1, single buffered']
    #allocation9 [shape = 's32[1]{0}', space=sflag, size = 0x4, scoped, tag = 'scoped memory for tpu_custom_call.1']
    %20 = vsyncpa [#allocation3], 0
    %21 = vsyncpa [#allocation6], 0
    %22 = vsyncpa [#allocation4], 0
    %23 = vsyncpa [#allocation9], 0
    // Predicated region
    $region2: #{tpu_custom_call.1} parent=1 // pred_check
      _
    $region3: #{tpu_custom_call.1} parent=1 // pred_check_branch
      %25 = sbr.rel (0) target = $region5
    $region4: #{tpu_custom_call.1} parent=1 // pred_region
      _
    $region5: #{tpu_custom_call.1} parent=1 // pred_fallthru
      _
    // Predicated region
    $region6: #{tpu_custom_call.1} parent=1 // pred_check
      _
    $region7: #{tpu_custom_call.1} parent=1 // pred_check_branch
      %27 = sbr.rel (0) target = $region9
    $region8: #{tpu_custom_call.1} parent=1 // pred_region
      _
    $region9: #{tpu_custom_call.1} parent=1 // pred_fallthru
      _
    // Predicated region
    $region10: #{tpu_custom_call.1} parent=1 // pred_check
      _
    $region11: #{tpu_custom_call.1} parent=1 // pred_check_branch
      %29 = sbr.rel (0) target = $region13
    $region12: #{tpu_custom_call.1} parent=1 // pred_region
      _
    $region13: #{tpu_custom_call.1} parent=1 // pred_fallthru
      _
    // Predicated region
    $region14: #{tpu_custom_call.1} parent=1 // pred_check
      _
    $region15: #{tpu_custom_call.1} parent=1 // pred_check_branch
      %31 = sbr.rel (0) target = $region17
    $region16: #{tpu_custom_call.1} parent=1 // pred_region
      _
    $region17: #{tpu_custom_call.1} parent=1 // pred_fallthru
      _
    // Predicated region
    $region18: #{tpu_custom_call.1} parent=1 // pred_check
      _
    $region19: #{tpu_custom_call.1} parent=1 // pred_check_branch
      %33 = sbr.rel (0) target = $region21
    $region20: #{tpu_custom_call.1} parent=1 // pred_region
      _
    $region21: #{tpu_custom_call.1} parent=1 // pred_fallthru
      _
    // Predicated region
    $region22: #{tpu_custom_call.1} parent=1 // pred_check
      _
    $region23: #{tpu_custom_call.1} parent=1 // pred_check_branch
      %35 = sbr.rel (0) target = $region25
    $region24: #{tpu_custom_call.1} parent=1 // pred_region
      _
    $region25: #{tpu_custom_call.1} parent=1 // pred_fallthru
      _
    // Predicated region
    $region26: #{tpu_custom_call.1} parent=1 // pred_check
      _
    $region27: #{tpu_custom_call.1} parent=1 // pred_check_branch
      %37 = sbr.rel (0) target = $region29
    $region28: #{tpu_custom_call.1} parent=1 // pred_region
      _
    $region29: #{tpu_custom_call.1} parent=1 // pred_fallthru
      _
    // Predicated region
    $region30: #{tpu_custom_call.1} parent=1 // pred_check
      _
    $region31: #{tpu_custom_call.1} parent=1 // pred_check_branch
      %39 = sbr.rel (0) target = $region33
    $region32: #{tpu_custom_call.1} parent=1 // pred_region
      _
    $region33: #{tpu_custom_call.1} parent=1 // pred_fallthru
      _
    // Predicated region
    $region34: #{tpu_custom_call.1} parent=1 // pred_check
      _
    $region35: #{tpu_custom_call.1} parent=1 // pred_check_branch
      %41 = sbr.rel (0) target = $region37
    $region36: #{tpu_custom_call.1} parent=1 // pred_region
      _
    $region37: #{tpu_custom_call.1} parent=1 // pred_fallthru
      _
    // Predicated region
    $region38: #{tpu_custom_call.1} parent=1 // pred_check
      _
    $region39: #{tpu_custom_call.1} parent=1 // pred_check_branch
      %43 = sbr.rel (0) target = $region41
    $region40: #{tpu_custom_call.1} parent=1 // pred_region
      %s45 = ssub.s32 2048, 2048
      %46 = vsyncadd [#allocation3], %s45
      %s47 = sshll.u32 [#allocation2], 4
      %s48 = int_to_ptr.vmem [resolvable:$true] %s47
      %53 = dma.hbm_to_vmem [thread:$0]  %s9, 2048, %s48, [#allocation3], 128, 128, 8
    $region41: #{tpu_custom_call.1} parent=1 // pred_fallthru
      _
    // Predicated region
    $region42: #{tpu_custom_call.1} parent=1 // pred_check
      _
    $region43: #{tpu_custom_call.1} parent=1 // pred_check_branch
      %55 = sbr.rel (0) target = $region45
    $region44: #{tpu_custom_call.1} parent=1 // pred_region
      _
    $region45: #{tpu_custom_call.1} parent=1 // pred_fallthru
      _
    // Predicated region
    $region46: #{tpu_custom_call.1} parent=1 // pred_check
      _
    $region47: #{tpu_custom_call.1} parent=1 // pred_check_branch
      %57 = sbr.rel (0) target = $region49
    $region48: #{tpu_custom_call.1} parent=1 // pred_region
      %s59 = ssub.s32 2048, 2048
      %60 = vsyncadd [#allocation6], %s59
      %s61 = sshll.u32 [#allocation5], 4
      %s62 = int_to_ptr.vmem [resolvable:$true] %s61
      %67 = dma.hbm_to_vmem [thread:$0]  %s11, 2048, %s62, [#allocation6], 128, 128, 8
    $region49: #{tpu_custom_call.1} parent=1 // pred_fallthru
      _
    // Predicated region
    $region50: #{tpu_custom_call.1} parent=1 // pred_check
      _
    $region51: #{tpu_custom_call.1} parent=1 // pred_check_branch
      %69 = sbr.rel (0) target = $region53
    $region52: #{tpu_custom_call.1} parent=1 // pred_region
      _
    $region53: #{tpu_custom_call.1} parent=1 // pred_fallthru
      _
    // Predicated region
    $region54: #{tpu_custom_call.1} parent=1 // pred_check
      _
    $region55: #{tpu_custom_call.1} parent=1 // pred_check_branch
      %71 = sbr.rel (0) target = $region57
    $region56: #{tpu_custom_call.1} parent=1 // pred_region
      %72 = dma.done [#allocation3], 2048
    $region57: #{tpu_custom_call.1} parent=1 // pred_fallthru
      _
    // Predicated region
    $region58: #{tpu_custom_call.1} parent=1 // pred_check
      _
    $region59: #{tpu_custom_call.1} parent=1 // pred_check_branch
      %74 = sbr.rel (0) target = $region61
    $region60: #{tpu_custom_call.1} parent=1 // pred_region
      %75 = dma.done [#allocation6], 2048
    $region61: #{tpu_custom_call.1} parent=1 // pred_fallthru
      _
    %v76 = vld [vmem:[%s0] sm:$0xff]
    %v77 = vld [vmem:[%s1] sm:$0xff]
    %v78 = vld [vmem:[%s2] sm:$0xff]
    %v79 = vld [vmem:[%s2 + $0x8] sm:$0xff]
    %v80 = vld [vmem:[%s2 + $0x10] sm:$0xff]
    %v81 = vld [vmem:[%s2 + $0x18] sm:$0xff]
    %v82 = vld [vmem:[%s2 + $0x20] sm:$0xff]
    %v83 = vld [vmem:[%s2 + $0x28] sm:$0xff]
    %v84 = vld [vmem:[%s2 + $0x30] sm:$0xff]
    %v85 = vld [vmem:[%s2 + $0x38] sm:$0xff]
    %v86 = vld [vmem:[%s5] sm:$0xff]
    %v87 = vld [vmem:[%s5 + $0x8] sm:$0xff]
    %v88 = vld [vmem:[%s7] sm:$0x1]
    %v90 = vlaneseq
    %v91 = vshrl.u32 %v90, 7
    %v92 = vsub.s32 0, %v91
    %v93 = vrot.slane %v88, %v92
    %vm95 = vcmask 130048
    %v97 = vsel %vm95, %v78, 0
    %v100 = vsel %vm95, %v79, 0
    %v103 = vsel %vm95, %v80, 0
    %v106 = vsel %vm95, %v81, 0
    %v109 = vsel %vm95, %v82, 0
    %v112 = vsel %vm95, %v83, 0
    %v115 = vsel %vm95, %v84, 0
    %v118 = vsel %vm95, %v85, 0
    %120 = vmatprep.subr.mxu0 0.0
    %121 = vmatpush1.msra.mxu0 %v86
    %122 = vmatprep.subr.mxu0 0.0
    %123 = vmatpush1.msra.mxu0 %v87
    %124 = vmatprep.subr.mxu0 0.0
    %125 = vmatpush1.msra.mxu0 0.0
    %126 = vmatprep.subr.mxu0 0.0
    %127 = vmatpush1.msra.mxu0 0.0
    %128 = vmatprep.subr.mxu0 0.0
    %129 = vmatpush1.msra.mxu0 0.0
    %130 = vmatprep.subr.mxu0 0.0
    %131 = vmatpush1.msra.mxu0 0.0
    %132 = vmatprep.subr.mxu0 0.0
    %133 = vmatpush1.msra.mxu0 0.0
    %134 = vmatprep.subr.mxu0 0.0
    %135 = vmatpush1.msra.mxu0 0.0
    %136 = vmatprep.subr.mxu0 0.0
    %137 = vmatpush1.msra.mxu0 0.0
    %138 = vmatprep.subr.mxu0 0.0
    %139 = vmatpush1.msra.mxu0 0.0
    %140 = vmatprep.subr.mxu0 0.0
    %141 = vmatpush1.msra.mxu0 0.0
    %142 = vmatprep.subr.mxu0 0.0
    %143 = vmatpush1.msra.mxu0 0.0
    %144 = vmatprep.subr.mxu0 0.0
    %145 = vmatpush1.msra.mxu0 0.0
    %146 = vmatprep.subr.mxu0 0.0
    %147 = vmatpush1.msra.mxu0 0.0
    %148 = vmatprep.subr.mxu0 0.0
    %149 = vmatpush1.msra.mxu0 0.0
    %150 = vmatprep.subr.mxu0 0.0
    %151 = vmatpush1.msra.mxu0 0.0
    %152 = vmatprep.subr.mxu0 0.0
    %153 = vmatpush1.msra.mxu0 0.0
    %154 = vmatprep.subr.mxu0 0.0
    %155 = vmatpush1.msra.mxu0 0.0
    %156 = vmatprep.subr.mxu0 0.0
    %157 = vmatpush1.msra.mxu0 0.0
    %158 = vmatprep.subr.mxu0 0.0
    %159 = vmatpush1.msra.mxu0 0.0
    %160 = vmatprep.subr.mxu0 0.0
    %161 = vmatpush1.msra.mxu0 0.0
    %162 = vmatprep.subr.mxu0 0.0
    %163 = vmatpush1.msra.mxu0 0.0
    %164 = vmatprep.subr.mxu0 0.0
    %165 = vmatpush1.msra.mxu0 0.0
    %166 = vmatprep.subr.mxu0 0.0
    %167 = vmatpush1.msra.mxu0 0.0
    %168 = vmatprep.subr.mxu0 0.0
    %169 = vmatpush1.msra.mxu0 0.0
    %170 = vmatprep.subr.mxu0 0.0
    %171 = vmatpush1.msra.mxu0 0.0
    %172 = vmatprep.subr.mxu0 0.0
    %173 = vmatpush1.msra.mxu0 0.0
    %174 = vmatprep.subr.mxu0 0.0
    %175 = vmatpush1.msra.mxu0 0.0
    %176 = vmatprep.subr.mxu0 0.0
    %177 = vmatpush1.msra.mxu0 0.0
    %178 = vmatprep.subr.mxu0 0.0
    %179 = vmatpush1.msra.mxu0 0.0
    %180 = vmatprep.subr.mxu0 0.0
    %181 = vmatpush1.msra.mxu0 0.0
    %182 = vmatprep.subr.mxu0 0.0
    %183 = vmatpush1.msra.mxu0 0.0
    %184 = vmatprep.mubr.f32.mxu0 0.0
    %185 = vmatmul.mubr.f32.gmra.mrb[0].mxu0 %v97
    %v186 = vpop.f32.mrb[0].mxu0
    %v187 = vadd.f32 %v93, %v186
    %v188 = vpop.f32.mrb[0].mxu0
    %189 = vmatprep.mubr.f32.mxu0 0.0
    %190 = vmatmul.mubr.f32.gmra.mrb[0].mxu0 %v100
    %v191 = vpop.f32.mrb[0].mxu0
    %v192 = vadd.f32 %v93, %v191
    %v193 = vpop.f32.mrb[0].mxu0
    %194 = vmatprep.mubr.f32.mxu0 0.0
    %195 = vmatmul.mubr.f32.gmra.mrb[0].mxu0 %v103
    %v196 = vpop.f32.mrb[0].mxu0
    %v197 = vadd.f32 %v93, %v196
    %v198 = vpop.f32.mrb[0].mxu0
    %199 = vmatprep.mubr.f32.mxu0 0.0
    %200 = vmatmul.mubr.f32.gmra.mrb[0].mxu0 %v106
    %v201 = vpop.f32.mrb[0].mxu0
    %v202 = vadd.f32 %v93, %v201
    %v203 = vpop.f32.mrb[0].mxu0
    %204 = vmatprep.mubr.f32.mxu0 0.0
    %205 = vmatmul.mubr.f32.gmra.mrb[0].mxu0 %v109
    %v206 = vpop.f32.mrb[0].mxu0
    %v207 = vadd.f32 %v93, %v206
    %v208 = vpop.f32.mrb[0].mxu0
    %209 = vmatprep.mubr.f32.mxu0 0.0
    %210 = vmatmul.mubr.f32.gmra.mrb[0].mxu0 %v112
    %v211 = vpop.f32.mrb[0].mxu0
    %v212 = vadd.f32 %v93, %v211
    %v213 = vpop.f32.mrb[0].mxu0
    %214 = vmatprep.mubr.f32.mxu0 0.0
    %215 = vmatmul.mubr.f32.gmra.mrb[0].mxu0 %v115
    %v216 = vpop.f32.mrb[0].mxu0
    %v217 = vadd.f32 %v93, %v216
    %v218 = vpop.f32.mrb[0].mxu0
    %219 = vmatprep.mubr.f32.mxu0 0.0
    %220 = vmatmul.mubr.f32.gmra.mrb[0].mxu0 %v118
    %v221 = vpop.f32.mrb[0].mxu0
    %v222 = vadd.f32 %v93, %v221
    %v223 = vpop.f32.mrb[0].mxu0
    %224 = vdwg.mxu0
    %v225 = vld [vmem:[%s6] sm:$0xff]
    %v226 = vld [vmem:[%s6 + $0x8] sm:$0xff]
    %v227 = vld [vmem:[%s6 + $0x10] sm:$0xff]
    %v228 = vld [vmem:[%s6 + $0x18] sm:$0xff]
    %v229 = vld [vmem:[%s6 + $0x20] sm:$0xff]
    %v230 = vld [vmem:[%s6 + $0x28] sm:$0xff]
    %v231 = vld [vmem:[%s6 + $0x30] sm:$0xff]
    %v232 = vld [vmem:[%s6 + $0x38] sm:$0xff]
    %v233 = vld [vmem:[%s6 + $0x40] sm:$0xff]
    %v234 = vld [vmem:[%s6 + $0x48] sm:$0xff]
    %v235 = vld [vmem:[%s6 + $0x50] sm:$0xff]
    %v236 = vld [vmem:[%s6 + $0x58] sm:$0xff]
    %v237 = vld [vmem:[%s6 + $0x60] sm:$0xff]
    %v238 = vld [vmem:[%s6 + $0x68] sm:$0xff]
    %v239 = vld [vmem:[%s6 + $0x70] sm:$0xff]
    %v240 = vld [vmem:[%s6 + $0x78] sm:$0xff]
    %241 = vmatprep.subr.mxu0 0.0
    %242 = vmatpush1.msra.mxu0 %v225
    %243 = vmatprep.subr.mxu0 0.0
    %244 = vmatpush1.msra.mxu0 %v226
    %245 = vmatprep.subr.mxu0 0.0
    %246 = vmatpush1.msra.mxu0 %v227
    %247 = vmatprep.subr.mxu0 0.0
    %248 = vmatpush1.msra.mxu0 %v228
    %249 = vmatprep.subr.mxu0 0.0
    %250 = vmatpush1.msra.mxu0 %v229
    %251 = vmatprep.subr.mxu0 0.0
    %252 = vmatpush1.msra.mxu0 %v230
    %253 = vmatprep.subr.mxu0 0.0
    %254 = vmatpush1.msra.mxu0 %v231
    %255 = vmatprep.subr.mxu0 0.0
    %256 = vmatpush1.msra.mxu0 %v232
    %257 = vmatprep.subr.mxu0 0.0
    %258 = vmatpush1.msra.mxu0 %v233
    %259 = vmatprep.subr.mxu0 0.0
    %260 = vmatpush1.msra.mxu0 %v234
    %261 = vmatprep.subr.mxu0 0.0
    %262 = vmatpush1.msra.mxu0 %v235
    %263 = vmatprep.subr.mxu0 0.0
    %264 = vmatpush1.msra.mxu0 %v236
    %265 = vmatprep.subr.mxu0 0.0
    %266 = vmatpush1.msra.mxu0 %v237
    %267 = vmatprep.subr.mxu0 0.0
    %268 = vmatpush1.msra.mxu0 %v238
    %269 = vmatprep.subr.mxu0 0.0
    %270 = vmatpush1.msra.mxu0 %v239
    %271 = vmatprep.subr.mxu0 0.0
    %272 = vmatpush1.msra.mxu0 %v240
    %273 = vmatprep.subr.mxu0 0.0
    %274 = vmatpush1.msra.mxu0 0.0
    %275 = vmatprep.subr.mxu0 0.0
    %276 = vmatpush1.msra.mxu0 0.0
    %277 = vmatprep.subr.mxu0 0.0
    %278 = vmatpush1.msra.mxu0 0.0
    %279 = vmatprep.subr.mxu0 0.0
    %280 = vmatpush1.msra.mxu0 0.0
    %281 = vmatprep.subr.mxu0 0.0
    %282 = vmatpush1.msra.mxu0 0.0
    %283 = vmatprep.subr.mxu0 0.0
    %284 = vmatpush1.msra.mxu0 0.0
    %285 = vmatprep.subr.mxu0 0.0
    %286 = vmatpush1.msra.mxu0 0.0
    %287 = vmatprep.subr.mxu0 0.0
    %288 = vmatpush1.msra.mxu0 0.0
    %289 = vmatprep.subr.mxu0 0.0
    %290 = vmatpush1.msra.mxu0 0.0
    %291 = vmatprep.subr.mxu0 0.0
    %292 = vmatpush1.msra.mxu0 0.0
    %293 = vmatprep.subr.mxu0 0.0
    %294 = vmatpush1.msra.mxu0 0.0
    %295 = vmatprep.subr.mxu0 0.0
    %296 = vmatpush1.msra.mxu0 0.0
    %297 = vmatprep.subr.mxu0 0.0
    %298 = vmatpush1.msra.mxu0 0.0
    %299 = vmatprep.subr.mxu0 0.0
    %300 = vmatpush1.msra.mxu0 0.0
    %301 = vmatprep.subr.mxu0 0.0
    %302 = vmatpush1.msra.mxu0 0.0
    %303 = vmatprep.subr.mxu0 0.0
    %304 = vmatpush1.msra.mxu0 0.0
    %305 = vmatprep.mubr.f32.mxu0 0.0
    %306 = vmatmul.mubr.f32.gmra.mrb[0].mxu0 0.0
    %v307 = vpop.f32.mrb[0].mxu0
    %v308 = vadd.f32 0.0, %v307
    %v309 = vpop.f32.mrb[0].mxu0
    %310 = vdwg.mxu0
    %v311 = vadd.f32 %v187, %v308
    %v312 = vtanh.pop %v311
    %vm313 = vcmp.gt.s32.totalorder %v76, 0
    %v314 = vsel %vm313, 1, 0
    %315 = vset.pattern.permute.xlu0 0
    %316 = vperm.xlu0 %315, %v314
    %v317 = vpop.permute.xlu0 %316
    %vm318 = vcmp.eq.s32.totalorder %v317, 1
    %v319 = vsel %vm318, %v312, 0.0
    %320 = vmatprep.subr.mxu0 0.0
    %321 = vmatpush1.msra.mxu0 %v225
    %322 = vmatprep.subr.mxu0 0.0
    %323 = vmatpush1.msra.mxu0 %v226
    %324 = vmatprep.subr.mxu0 0.0
    %325 = vmatpush1.msra.mxu0 %v227
    %326 = vmatprep.subr.mxu0 0.0
    %327 = vmatpush1.msra.mxu0 %v228
    %328 = vmatprep.subr.mxu0 0.0
    %329 = vmatpush1.msra.mxu0 %v229
    %330 = vmatprep.subr.mxu0 0.0
    %331 = vmatpush1.msra.mxu0 %v230
    %332 = vmatprep.subr.mxu0 0.0
    %333 = vmatpush1.msra.mxu0 %v231
    %334 = vmatprep.subr.mxu0 0.0
    %335 = vmatpush1.msra.mxu0 %v232
    %336 = vmatprep.subr.mxu0 0.0
    %337 = vmatpush1.msra.mxu0 %v233
    %338 = vmatprep.subr.mxu0 0.0
    %339 = vmatpush1.msra.mxu0 %v234
    %340 = vmatprep.subr.mxu0 0.0
    %341 = vmatpush1.msra.mxu0 %v235
    %342 = vmatprep.subr.mxu0 0.0
    %343 = vmatpush1.msra.mxu0 %v236
    %344 = vmatprep.subr.mxu0 0.0
    %345 = vmatpush1.msra.mxu0 %v237
    %346 = vmatprep.subr.mxu0 0.0
    %347 = vmatpush1.msra.mxu0 %v238
    %348 = vmatprep.subr.mxu0 0.0
    %349 = vmatpush1.msra.mxu0 %v239
    %350 = vmatprep.subr.mxu0 0.0
    %351 = vmatpush1.msra.mxu0 %v240
    %352 = vmatprep.subr.mxu0 0.0
    %353 = vmatpush1.msra.mxu0 0.0
    %354 = vmatprep.subr.mxu0 0.0
    %355 = vmatpush1.msra.mxu0 0.0
    %356 = vmatprep.subr.mxu0 0.0
    %357 = vmatpush1.msra.mxu0 0.0
    %358 = vmatprep.subr.mxu0 0.0
    %359 = vmatpush1.msra.mxu0 0.0
    %360 = vmatprep.subr.mxu0 0.0
    %361 = vmatpush1.msra.mxu0 0.0
    %362 = vmatprep.subr.mxu0 0.0
    %363 = vmatpush1.msra.mxu0 0.0
    %364 = vmatprep.subr.mxu0 0.0
    %365 = vmatpush1.msra.mxu0 0.0
    %366 = vmatprep.subr.mxu0 0.0
    %367 = vmatpush1.msra.mxu0 0.0
    %368 = vmatprep.subr.mxu0 0.0
    %369 = vmatpush1.msra.mxu0 0.0
    %370 = vmatprep.subr.mxu0 0.0
    %371 = vmatpush1.msra.mxu0 0.0
    %372 = vmatprep.subr.mxu0 0.0
    %373 = vmatpush1.msra.mxu0 0.0
    %374 = vmatprep.subr.mxu0 0.0
    %375 = vmatpush1.msra.mxu0 0.0
    %376 = vmatprep.subr.mxu0 0.0
    %377 = vmatpush1.msra.mxu0 0.0
    %378 = vmatprep.subr.mxu0 0.0
    %379 = vmatpush1.msra.mxu0 0.0
    %380 = vmatprep.subr.mxu0 0.0
    %381 = vmatpush1.msra.mxu0 0.0
    %382 = vmatprep.subr.mxu0 0.0
    %383 = vmatpush1.msra.mxu0 0.0
    %384 = vmatprep.mubr.f32.mxu0 0.0
    %385 = vmatmul.mubr.f32.gmra.mrb[0].mxu0 %v319
    %v386 = vpop.f32.mrb[0].mxu0
    %v387 = vadd.f32 0.0, %v386
    %v388 = vpop.f32.mrb[0].mxu0
    %389 = vdwg.mxu0
    %v390 = vadd.f32 %v192, %v387
    %v391 = vtanh.pop %v390
    %vm392 = vcmp.gt.s32.totalorder %v76, 1
    %v393 = vsel %vm392, 1, 0
    %394 = vset.pattern.permute.xlu0 0
    %395 = vperm.xlu0 %394, %v393
    %v396 = vpop.permute.xlu0 %395
    %vm397 = vcmp.eq.s32.totalorder %v396, 1
    %v398 = vsel %vm397, %v391, %v319
    %399 = vmatprep.subr.mxu0 0.0
    %400 = vmatpush1.msra.mxu0 %v225
    %401 = vmatprep.subr.mxu0 0.0
    %402 = vmatpush1.msra.mxu0 %v226
    %403 = vmatprep.subr.mxu0 0.0
    %404 = vmatpush1.msra.mxu0 %v227
    %405 = vmatprep.subr.mxu0 0.0
    %406 = vmatpush1.msra.mxu0 %v228
    %407 = vmatprep.subr.mxu0 0.0
    %408 = vmatpush1.msra.mxu0 %v229
    %409 = vmatprep.subr.mxu0 0.0
    %410 = vmatpush1.msra.mxu0 %v230
    %411 = vmatprep.subr.mxu0 0.0
    %412 = vmatpush1.msra.mxu0 %v231
    %413 = vmatprep.subr.mxu0 0.0
    %414 = vmatpush1.msra.mxu0 %v232
    %415 = vmatprep.subr.mxu0 0.0
    %416 = vmatpush1.msra.mxu0 %v233
    %417 = vmatprep.subr.mxu0 0.0
    %418 = vmatpush1.msra.mxu0 %v234
    %419 = vmatprep.subr.mxu0 0.0
    %420 = vmatpush1.msra.mxu0 %v235
    %421 = vmatprep.subr.mxu0 0.0
    %422 = vmatpush1.msra.mxu0 %v236
    %423 = vmatprep.subr.mxu0 0.0
    %424 = vmatpush1.msra.mxu0 %v237
    %425 = vmatprep.subr.mxu0 0.0
    %426 = vmatpush1.msra.mxu0 %v238
    %427 = vmatprep.subr.mxu0 0.0
    %428 = vmatpush1.msra.mxu0 %v239
    %429 = vmatprep.subr.mxu0 0.0
    %430 = vmatpush1.msra.mxu0 %v240
    %431 = vmatprep.subr.mxu0 0.0
    %432 = vmatpush1.msra.mxu0 0.0
    %433 = vmatprep.subr.mxu0 0.0
    %434 = vmatpush1.msra.mxu0 0.0
    %435 = vmatprep.subr.mxu0 0.0
    %436 = vmatpush1.msra.mxu0 0.0
    %437 = vmatprep.subr.mxu0 0.0
    %438 = vmatpush1.msra.mxu0 0.0
    %439 = vmatprep.subr.mxu0 0.0
    %440 = vmatpush1.msra.mxu0 0.0
    %441 = vmatprep.subr.mxu0 0.0
    %442 = vmatpush1.msra.mxu0 0.0
    %443 = vmatprep.subr.mxu0 0.0
    %444 = vmatpush1.msra.mxu0 0.0
    %445 = vmatprep.subr.mxu0 0.0
    %446 = vmatpush1.msra.mxu0 0.0
    %447 = vmatprep.subr.mxu0 0.0
    %448 = vmatpush1.msra.mxu0 0.0
    %449 = vmatprep.subr.mxu0 0.0
    %450 = vmatpush1.msra.mxu0 0.0
    %451 = vmatprep.subr.mxu0 0.0
    %452 = vmatpush1.msra.mxu0 0.0
    %453 = vmatprep.subr.mxu0 0.0
    %454 = vmatpush1.msra.mxu0 0.0
    %455 = vmatprep.subr.mxu0 0.0
    %456 = vmatpush1.msra.mxu0 0.0
    %457 = vmatprep.subr.mxu0 0.0
    %458 = vmatpush1.msra.mxu0 0.0
    %459 = vmatprep.subr.mxu0 0.0
    %460 = vmatpush1.msra.mxu0 0.0
    %461 = vmatprep.subr.mxu0 0.0
    %462 = vmatpush1.msra.mxu0 0.0
    %463 = vmatprep.mubr.f32.mxu0 0.0
    %464 = vmatmul.mubr.f32.gmra.mrb[0].mxu0 %v398
    %v465 = vpop.f32.mrb[0].mxu0
    %v466 = vadd.f32 0.0, %v465
    %v467 = vpop.f32.mrb[0].mxu0
    %468 = vdwg.mxu0
    %v469 = vadd.f32 %v197, %v466
    %v470 = vtanh.pop %v469
    %vm471 = vcmp.gt.s32.totalorder %v76, 2
    %v472 = vsel %vm471, 1, 0
    %473 = vset.pattern.permute.xlu0 0
    %474 = vperm.xlu0 %473, %v472
    %v475 = vpop.permute.xlu0 %474
    %vm476 = vcmp.eq.s32.totalorder %v475, 1
    %v477 = vsel %vm476, %v470, %v398
    %478 = vmatprep.subr.mxu0 0.0
    %479 = vmatpush1.msra.mxu0 %v225
    %480 = vmatprep.subr.mxu0 0.0
    %481 = vmatpush1.msra.mxu0 %v226
    %482 = vmatprep.subr.mxu0 0.0
    %483 = vmatpush1.msra.mxu0 %v227
    %484 = vmatprep.subr.mxu0 0.0
    %485 = vmatpush1.msra.mxu0 %v228
    %486 = vmatprep.subr.mxu0 0.0
    %487 = vmatpush1.msra.mxu0 %v229
    %488 = vmatprep.subr.mxu0 0.0
    %489 = vmatpush1.msra.mxu0 %v230
    %490 = vmatprep.subr.mxu0 0.0
    %491 = vmatpush1.msra.mxu0 %v231
    %492 = vmatprep.subr.mxu0 0.0
    %493 = vmatpush1.msra.mxu0 %v232
    %494 = vmatprep.subr.mxu0 0.0
    %495 = vmatpush1.msra.mxu0 %v233
    %496 = vmatprep.subr.mxu0 0.0
    %497 = vmatpush1.msra.mxu0 %v234
    %498 = vmatprep.subr.mxu0 0.0
    %499 = vmatpush1.msra.mxu0 %v235
    %500 = vmatprep.subr.mxu0 0.0
    %501 = vmatpush1.msra.mxu0 %v236
    %502 = vmatprep.subr.mxu0 0.0
    %503 = vmatpush1.msra.mxu0 %v237
    %504 = vmatprep.subr.mxu0 0.0
    %505 = vmatpush1.msra.mxu0 %v238
    %506 = vmatprep.subr.mxu0 0.0
    %507 = vmatpush1.msra.mxu0 %v239
    %508 = vmatprep.subr.mxu0 0.0
    %509 = vmatpush1.msra.mxu0 %v240
    %510 = vmatprep.subr.mxu0 0.0
    %511 = vmatpush1.msra.mxu0 0.0
    %512 = vmatprep.subr.mxu0 0.0
    %513 = vmatpush1.msra.mxu0 0.0
    %514 = vmatprep.subr.mxu0 0.0
    %515 = vmatpush1.msra.mxu0 0.0
    %516 = vmatprep.subr.mxu0 0.0
    %517 = vmatpush1.msra.mxu0 0.0
    %518 = vmatprep.subr.mxu0 0.0
    %519 = vmatpush1.msra.mxu0 0.0
    %520 = vmatprep.subr.mxu0 0.0
    %521 = vmatpush1.msra.mxu0 0.0
    %522 = vmatprep.subr.mxu0 0.0
    %523 = vmatpush1.msra.mxu0 0.0
    %524 = vmatprep.subr.mxu0 0.0
    %525 = vmatpush1.msra.mxu0 0.0
    %526 = vmatprep.subr.mxu0 0.0
    %527 = vmatpush1.msra.mxu0 0.0
    %528 = vmatprep.subr.mxu0 0.0
    %529 = vmatpush1.msra.mxu0 0.0
    %530 = vmatprep.subr.mxu0 0.0
    %531 = vmatpush1.msra.mxu0 0.0
    %532 = vmatprep.subr.mxu0 0.0
    %533 = vmatpush1.msra.mxu0 0.0
    %534 = vmatprep.subr.mxu0 0.0
    %535 = vmatpush1.msra.mxu0 0.0
    %536 = vmatprep.subr.mxu0 0.0
    %537 = vmatpush1.msra.mxu0 0.0
    %538 = vmatprep.subr.mxu0 0.0
    %539 = vmatpush1.msra.mxu0 0.0
    %540 = vmatprep.subr.mxu0 0.0
    %541 = vmatpush1.msra.mxu0 0.0
    %542 = vmatprep.mubr.f32.mxu0 0.0
    %543 = vmatmul.mubr.f32.gmra.mrb[0].mxu0 %v477
    %v544 = vpop.f32.mrb[0].mxu0
    %v545 = vadd.f32 0.0, %v544
    %v546 = vpop.f32.mrb[0].mxu0
    %547 = vdwg.mxu0
    %v548 = vadd.f32 %v202, %v545
    %v549 = vtanh.pop %v548
    %vm550 = vcmp.gt.s32.totalorder %v76, 3
    %v551 = vsel %vm550, 1, 0
    %552 = vset.pattern.permute.xlu0 0
    %553 = vperm.xlu0 %552, %v551
    %v554 = vpop.permute.xlu0 %553
    %vm555 = vcmp.eq.s32.totalorder %v554, 1
    %v556 = vsel %vm555, %v549, %v477
    %557 = vmatprep.subr.mxu0 0.0
    %558 = vmatpush1.msra.mxu0 %v225
    %559 = vmatprep.subr.mxu0 0.0
    %560 = vmatpush1.msra.mxu0 %v226
    %561 = vmatprep.subr.mxu0 0.0
    %562 = vmatpush1.msra.mxu0 %v227
    %563 = vmatprep.subr.mxu0 0.0
    %564 = vmatpush1.msra.mxu0 %v228
    %565 = vmatprep.subr.mxu0 0.0
    %566 = vmatpush1.msra.mxu0 %v229
    %567 = vmatprep.subr.mxu0 0.0
    %568 = vmatpush1.msra.mxu0 %v230
    %569 = vmatprep.subr.mxu0 0.0
    %570 = vmatpush1.msra.mxu0 %v231
    %571 = vmatprep.subr.mxu0 0.0
    %572 = vmatpush1.msra.mxu0 %v232
    %573 = vmatprep.subr.mxu0 0.0
    %574 = vmatpush1.msra.mxu0 %v233
    %575 = vmatprep.subr.mxu0 0.0
    %576 = vmatpush1.msra.mxu0 %v234
    %577 = vmatprep.subr.mxu0 0.0
    %578 = vmatpush1.msra.mxu0 %v235
    %579 = vmatprep.subr.mxu0 0.0
    %580 = vmatpush1.msra.mxu0 %v236
    %581 = vmatprep.subr.mxu0 0.0
    %582 = vmatpush1.msra.mxu0 %v237
    %583 = vmatprep.subr.mxu0 0.0
    %584 = vmatpush1.msra.mxu0 %v238
    %585 = vmatprep.subr.mxu0 0.0
    %586 = vmatpush1.msra.mxu0 %v239
    %587 = vmatprep.subr.mxu0 0.0
    %588 = vmatpush1.msra.mxu0 %v240
    %589 = vmatprep.subr.mxu0 0.0
    %590 = vmatpush1.msra.mxu0 0.0
    %591 = vmatprep.subr.mxu0 0.0
    %592 = vmatpush1.msra.mxu0 0.0
    %593 = vmatprep.subr.mxu0 0.0
    %594 = vmatpush1.msra.mxu0 0.0
    %595 = vmatprep.subr.mxu0 0.0
    %596 = vmatpush1.msra.mxu0 0.0
    %597 = vmatprep.subr.mxu0 0.0
    %598 = vmatpush1.msra.mxu0 0.0
    %599 = vmatprep.subr.mxu0 0.0
    %600 = vmatpush1.msra.mxu0 0.0
    %601 = vmatprep.subr.mxu0 0.0
    %602 = vmatpush1.msra.mxu0 0.0
    %603 = vmatprep.subr.mxu0 0.0
    %604 = vmatpush1.msra.mxu0 0.0
    %605 = vmatprep.subr.mxu0 0.0
    %606 = vmatpush1.msra.mxu0 0.0
    %607 = vmatprep.subr.mxu0 0.0
    %608 = vmatpush1.msra.mxu0 0.0
    %609 = vmatprep.subr.mxu0 0.0
    %610 = vmatpush1.msra.mxu0 0.0
    %611 = vmatprep.subr.mxu0 0.0
    %612 = vmatpush1.msra.mxu0 0.0
    %613 = vmatprep.subr.mxu0 0.0
    %614 = vmatpush1.msra.mxu0 0.0
    %615 = vmatprep.subr.mxu0 0.0
    %616 = vmatpush1.msra.mxu0 0.0
    %617 = vmatprep.subr.mxu0 0.0
    %618 = vmatpush1.msra.mxu0 0.0
    %619 = vmatprep.subr.mxu0 0.0
    %620 = vmatpush1.msra.mxu0 0.0
    %621 = vmatprep.mubr.f32.mxu0 0.0
    %622 = vmatmul.mubr.f32.gmra.mrb[0].mxu0 %v556
    %v623 = vpop.f32.mrb[0].mxu0
    %v624 = vadd.f32 0.0, %v623
    %v625 = vpop.f32.mrb[0].mxu0
    %626 = vdwg.mxu0
    %v627 = vadd.f32 %v207, %v624
    %v628 = vtanh.pop %v627
    %vm629 = vcmp.gt.s32.totalorder %v76, 4
    %v630 = vsel %vm629, 1, 0
    %631 = vset.pattern.permute.xlu0 0
    %632 = vperm.xlu0 %631, %v630
    %v633 = vpop.permute.xlu0 %632
    %vm634 = vcmp.eq.s32.totalorder %v633, 1
    %v635 = vsel %vm634, %v628, %v556
    %636 = vmatprep.subr.mxu0 0.0
    %637 = vmatpush1.msra.mxu0 %v225
    %638 = vmatprep.subr.mxu0 0.0
    %639 = vmatpush1.msra.mxu0 %v226
    %640 = vmatprep.subr.mxu0 0.0
    %641 = vmatpush1.msra.mxu0 %v227
    %642 = vmatprep.subr.mxu0 0.0
    %643 = vmatpush1.msra.mxu0 %v228
    %644 = vmatprep.subr.mxu0 0.0
    %645 = vmatpush1.msra.mxu0 %v229
    %646 = vmatprep.subr.mxu0 0.0
    %647 = vmatpush1.msra.mxu0 %v230
    %648 = vmatprep.subr.mxu0 0.0
    %649 = vmatpush1.msra.mxu0 %v231
    %650 = vmatprep.subr.mxu0 0.0
    %651 = vmatpush1.msra.mxu0 %v232
    %652 = vmatprep.subr.mxu0 0.0
    %653 = vmatpush1.msra.mxu0 %v233
    %654 = vmatprep.subr.mxu0 0.0
    %655 = vmatpush1.msra.mxu0 %v234
    %656 = vmatprep.subr.mxu0 0.0
    %657 = vmatpush1.msra.mxu0 %v235
    %658 = vmatprep.subr.mxu0 0.0
    %659 = vmatpush1.msra.mxu0 %v236
    %660 = vmatprep.subr.mxu0 0.0
    %661 = vmatpush1.msra.mxu0 %v237
    %662 = vmatprep.subr.mxu0 0.0
    %663 = vmatpush1.msra.mxu0 %v238
    %664 = vmatprep.subr.mxu0 0.0
    %665 = vmatpush1.msra.mxu0 %v239
    %666 = vmatprep.subr.mxu0 0.0
    %667 = vmatpush1.msra.mxu0 %v240
    %668 = vmatprep.subr.mxu0 0.0
    %669 = vmatpush1.msra.mxu0 0.0
    %670 = vmatprep.subr.mxu0 0.0
    %671 = vmatpush1.msra.mxu0 0.0
    %672 = vmatprep.subr.mxu0 0.0
    %673 = vmatpush1.msra.mxu0 0.0
    %674 = vmatprep.subr.mxu0 0.0
    %675 = vmatpush1.msra.mxu0 0.0
    %676 = vmatprep.subr.mxu0 0.0
    %677 = vmatpush1.msra.mxu0 0.0
    %678 = vmatprep.subr.mxu0 0.0
    %679 = vmatpush1.msra.mxu0 0.0
    %680 = vmatprep.subr.mxu0 0.0
    %681 = vmatpush1.msra.mxu0 0.0
    %682 = vmatprep.subr.mxu0 0.0
    %683 = vmatpush1.msra.mxu0 0.0
    %684 = vmatprep.subr.mxu0 0.0
    %685 = vmatpush1.msra.mxu0 0.0
    %686 = vmatprep.subr.mxu0 0.0
    %687 = vmatpush1.msra.mxu0 0.0
    %688 = vmatprep.subr.mxu0 0.0
    %689 = vmatpush1.msra.mxu0 0.0
    %690 = vmatprep.subr.mxu0 0.0
    %691 = vmatpush1.msra.mxu0 0.0
    %692 = vmatprep.subr.mxu0 0.0
    %693 = vmatpush1.msra.mxu0 0.0
    %694 = vmatprep.subr.mxu0 0.0
    %695 = vmatpush1.msra.mxu0 0.0
    %696 = vmatprep.subr.mxu0 0.0
    %697 = vmatpush1.msra.mxu0 0.0
    %698 = vmatprep.subr.mxu0 0.0
    %699 = vmatpush1.msra.mxu0 0.0
    %700 = vmatprep.mubr.f32.mxu0 0.0
    %701 = vmatmul.mubr.f32.gmra.mrb[0].mxu0 %v635
    %v702 = vpop.f32.mrb[0].mxu0
    %v703 = vadd.f32 0.0, %v702
    %v704 = vpop.f32.mrb[0].mxu0
    %705 = vdwg.mxu0
    %v706 = vadd.f32 %v212, %v703
    %v707 = vtanh.pop %v706
    %vm708 = vcmp.gt.s32.totalorder %v76, 5
    %v709 = vsel %vm708, 1, 0
    %710 = vset.pattern.permute.xlu0 0
    %711 = vperm.xlu0 %710, %v709
    %v712 = vpop.permute.xlu0 %711
    %vm713 = vcmp.eq.s32.totalorder %v712, 1
    %v714 = vsel %vm713, %v707, %v635
    %715 = vmatprep.subr.mxu0 0.0
    %716 = vmatpush1.msra.mxu0 %v225
    %717 = vmatprep.subr.mxu0 0.0
    %718 = vmatpush1.msra.mxu0 %v226
    %719 = vmatprep.subr.mxu0 0.0
    %720 = vmatpush1.msra.mxu0 %v227
    %721 = vmatprep.subr.mxu0 0.0
    %722 = vmatpush1.msra.mxu0 %v228
    %723 = vmatprep.subr.mxu0 0.0
    %724 = vmatpush1.msra.mxu0 %v229
    %725 = vmatprep.subr.mxu0 0.0
    %726 = vmatpush1.msra.mxu0 %v230
    %727 = vmatprep.subr.mxu0 0.0
    %728 = vmatpush1.msra.mxu0 %v231
    %729 = vmatprep.subr.mxu0 0.0
    %730 = vmatpush1.msra.mxu0 %v232
    %731 = vmatprep.subr.mxu0 0.0
    %732 = vmatpush1.msra.mxu0 %v233
    %733 = vmatprep.subr.mxu0 0.0
    %734 = vmatpush1.msra.mxu0 %v234
    %735 = vmatprep.subr.mxu0 0.0
    %736 = vmatpush1.msra.mxu0 %v235
    %737 = vmatprep.subr.mxu0 0.0
    %738 = vmatpush1.msra.mxu0 %v236
    %739 = vmatprep.subr.mxu0 0.0
    %740 = vmatpush1.msra.mxu0 %v237
    %741 = vmatprep.subr.mxu0 0.0
    %742 = vmatpush1.msra.mxu0 %v238
    %743 = vmatprep.subr.mxu0 0.0
    %744 = vmatpush1.msra.mxu0 %v239
    %745 = vmatprep.subr.mxu0 0.0
    %746 = vmatpush1.msra.mxu0 %v240
    %747 = vmatprep.subr.mxu0 0.0
    %748 = vmatpush1.msra.mxu0 0.0
    %749 = vmatprep.subr.mxu0 0.0
    %750 = vmatpush1.msra.mxu0 0.0
    %751 = vmatprep.subr.mxu0 0.0
    %752 = vmatpush1.msra.mxu0 0.0
    %753 = vmatprep.subr.mxu0 0.0
    %754 = vmatpush1.msra.mxu0 0.0
    %755 = vmatprep.subr.mxu0 0.0
    %756 = vmatpush1.msra.mxu0 0.0
    %757 = vmatprep.subr.mxu0 0.0
    %758 = vmatpush1.msra.mxu0 0.0
    %759 = vmatprep.subr.mxu0 0.0
    %760 = vmatpush1.msra.mxu0 0.0
    %761 = vmatprep.subr.mxu0 0.0
    %762 = vmatpush1.msra.mxu0 0.0
    %763 = vmatprep.subr.mxu0 0.0
    %764 = vmatpush1.msra.mxu0 0.0
    %765 = vmatprep.subr.mxu0 0.0
    %766 = vmatpush1.msra.mxu0 0.0
    %767 = vmatprep.subr.mxu0 0.0
    %768 = vmatpush1.msra.mxu0 0.0
    %769 = vmatprep.subr.mxu0 0.0
    %770 = vmatpush1.msra.mxu0 0.0
    %771 = vmatprep.subr.mxu0 0.0
    %772 = vmatpush1.msra.mxu0 0.0
    %773 = vmatprep.subr.mxu0 0.0
    %774 = vmatpush1.msra.mxu0 0.0
    %775 = vmatprep.subr.mxu0 0.0
    %776 = vmatpush1.msra.mxu0 0.0
    %777 = vmatprep.subr.mxu0 0.0
    %778 = vmatpush1.msra.mxu0 0.0
    %779 = vmatprep.mubr.f32.mxu0 0.0
    %780 = vmatmul.mubr.f32.gmra.mrb[0].mxu0 %v714
    %v781 = vpop.f32.mrb[0].mxu0
    %v782 = vadd.f32 0.0, %v781
    %v783 = vpop.f32.mrb[0].mxu0
    %784 = vdwg.mxu0
    %v785 = vadd.f32 %v217, %v782
    %v786 = vtanh.pop %v785
    %vm787 = vcmp.gt.s32.totalorder %v76, 6
    %v788 = vsel %vm787, 1, 0
    %789 = vset.pattern.permute.xlu0 0
    %790 = vperm.xlu0 %789, %v788
    %v791 = vpop.permute.xlu0 %790
    %vm792 = vcmp.eq.s32.totalorder %v791, 1
    %v793 = vsel %vm792, %v786, %v714
    %794 = vmatprep.subr.mxu0 0.0
    %795 = vmatpush1.msra.mxu0 %v225
    %796 = vmatprep.subr.mxu0 0.0
    %797 = vmatpush1.msra.mxu0 %v226
    %798 = vmatprep.subr.mxu0 0.0
    %799 = vmatpush1.msra.mxu0 %v227
    %800 = vmatprep.subr.mxu0 0.0
    %801 = vmatpush1.msra.mxu0 %v228
    %802 = vmatprep.subr.mxu0 0.0
    %803 = vmatpush1.msra.mxu0 %v229
    %804 = vmatprep.subr.mxu0 0.0
    %805 = vmatpush1.msra.mxu0 %v230
    %806 = vmatprep.subr.mxu0 0.0
    %807 = vmatpush1.msra.mxu0 %v231
    %808 = vmatprep.subr.mxu0 0.0
    %809 = vmatpush1.msra.mxu0 %v232
    %810 = vmatprep.subr.mxu0 0.0
    %811 = vmatpush1.msra.mxu0 %v233
    %812 = vmatprep.subr.mxu0 0.0
    %813 = vmatpush1.msra.mxu0 %v234
    %814 = vmatprep.subr.mxu0 0.0
    %815 = vmatpush1.msra.mxu0 %v235
    %816 = vmatprep.subr.mxu0 0.0
    %817 = vmatpush1.msra.mxu0 %v236
    %818 = vmatprep.subr.mxu0 0.0
    %819 = vmatpush1.msra.mxu0 %v237
    %820 = vmatprep.subr.mxu0 0.0
    %821 = vmatpush1.msra.mxu0 %v238
    %822 = vmatprep.subr.mxu0 0.0
    %823 = vmatpush1.msra.mxu0 %v239
    %824 = vmatprep.subr.mxu0 0.0
    %825 = vmatpush1.msra.mxu0 %v240
    %826 = vmatprep.subr.mxu0 0.0
    %827 = vmatpush1.msra.mxu0 0.0
    %828 = vmatprep.subr.mxu0 0.0
    %829 = vmatpush1.msra.mxu0 0.0
    %830 = vmatprep.subr.mxu0 0.0
    %831 = vmatpush1.msra.mxu0 0.0
    %832 = vmatprep.subr.mxu0 0.0
    %833 = vmatpush1.msra.mxu0 0.0
    %834 = vmatprep.subr.mxu0 0.0
    %835 = vmatpush1.msra.mxu0 0.0
    %836 = vmatprep.subr.mxu0 0.0
    %837 = vmatpush1.msra.mxu0 0.0
    %838 = vmatprep.subr.mxu0 0.0
    %839 = vmatpush1.msra.mxu0 0.0
    %840 = vmatprep.subr.mxu0 0.0
    %841 = vmatpush1.msra.mxu0 0.0
    %842 = vmatprep.subr.mxu0 0.0
    %843 = vmatpush1.msra.mxu0 0.0
    %844 = vmatprep.subr.mxu0 0.0
    %845 = vmatpush1.msra.mxu0 0.0
    %846 = vmatprep.subr.mxu0 0.0
    %847 = vmatpush1.msra.mxu0 0.0
    %848 = vmatprep.subr.mxu0 0.0
    %849 = vmatpush1.msra.mxu0 0.0
    %850 = vmatprep.subr.mxu0 0.0
    %851 = vmatpush1.msra.mxu0 0.0
    %852 = vmatprep.subr.mxu0 0.0
    %853 = vmatpush1.msra.mxu0 0.0
    %854 = vmatprep.subr.mxu0 0.0
    %855 = vmatpush1.msra.mxu0 0.0
    %856 = vmatprep.subr.mxu0 0.0
    %857 = vmatpush1.msra.mxu0 0.0
    %858 = vmatprep.mubr.f32.mxu0 0.0
    %859 = vmatmul.mubr.f32.gmra.mrb[0].mxu0 %v793
    %v860 = vpop.f32.mrb[0].mxu0
    %v861 = vadd.f32 0.0, %v860
    %v862 = vpop.f32.mrb[0].mxu0
    %863 = vdwg.mxu0
    %v864 = vadd.f32 %v222, %v861
    %v865 = vtanh.pop %v864
    %vm866 = vcmp.gt.s32.totalorder %v76, 7
    %v867 = vsel %vm866, 1, 0
    %868 = vset.pattern.permute.xlu0 0
    %869 = vperm.xlu0 %868, %v867
    %v870 = vpop.permute.xlu0 %869
    %vm871 = vcmp.eq.s32.totalorder %v870, 1
    %v872 = vsel %vm871, %v865, %v793
    %v873 = vld [vmem:[%s4] sm:$0xff]
    %vm874 = vcmask 64512
    %v876 = vsel %vm874, %v873, 0
    %878 = vmatprep.subr.mxu0 0.0
    %879 = vmatpush1.msra.mxu0 %v872
    %880 = vmatprep.subr.mxu0 0.0
    %881 = vmatpush1.msra.mxu0 0.0
    %882 = vmatprep.subr.mxu0 0.0
    %883 = vmatpush1.msra.mxu0 0.0
    %884 = vmatprep.subr.mxu0 0.0
    %885 = vmatpush1.msra.mxu0 0.0
    %886 = vmatprep.subr.mxu0 0.0
    %887 = vmatpush1.msra.mxu0 0.0
    %888 = vmatprep.subr.mxu0 0.0
    %889 = vmatpush1.msra.mxu0 0.0
    %890 = vmatprep.subr.mxu0 0.0
    %891 = vmatpush1.msra.mxu0 0.0
    %892 = vmatprep.subr.mxu0 0.0
    %893 = vmatpush1.msra.mxu0 0.0
    %894 = vmatprep.subr.mxu0 0.0
    %895 = vmatpush1.msra.mxu0 0.0
    %896 = vmatprep.subr.mxu0 0.0
    %897 = vmatpush1.msra.mxu0 0.0
    %898 = vmatprep.subr.mxu0 0.0
    %899 = vmatpush1.msra.mxu0 0.0
    %900 = vmatprep.subr.mxu0 0.0
    %901 = vmatpush1.msra.mxu0 0.0
    %902 = vmatprep.subr.mxu0 0.0
    %903 = vmatpush1.msra.mxu0 0.0
    %904 = vmatprep.subr.mxu0 0.0
    %905 = vmatpush1.msra.mxu0 0.0
    %906 = vmatprep.subr.mxu0 0.0
    %907 = vmatpush1.msra.mxu0 0.0
    %908 = vmatprep.subr.mxu0 0.0
    %909 = vmatpush1.msra.mxu0 0.0
    %910 = vmatprep.subr.mxu0 0.0
    %911 = vmatpush1.msra.mxu0 0.0
    %912 = vmatprep.subr.mxu0 0.0
    %913 = vmatpush1.msra.mxu0 0.0
    %914 = vmatprep.subr.mxu0 0.0
    %915 = vmatpush1.msra.mxu0 0.0
    %916 = vmatprep.subr.mxu0 0.0
    %917 = vmatpush1.msra.mxu0 0.0
    %918 = vmatprep.subr.mxu0 0.0
    %919 = vmatpush1.msra.mxu0 0.0
    %920 = vmatprep.subr.mxu0 0.0
    %921 = vmatpush1.msra.mxu0 0.0
    %922 = vmatprep.subr.mxu0 0.0
    %923 = vmatpush1.msra.mxu0 0.0
    %924 = vmatprep.subr.mxu0 0.0
    %925 = vmatpush1.msra.mxu0 0.0
    %926 = vmatprep.subr.mxu0 0.0
    %927 = vmatpush1.msra.mxu0 0.0
    %928 = vmatprep.subr.mxu0 0.0
    %929 = vmatpush1.msra.mxu0 0.0
    %930 = vmatprep.subr.mxu0 0.0
    %931 = vmatpush1.msra.mxu0 0.0
    %932 = vmatprep.subr.mxu0 0.0
    %933 = vmatpush1.msra.mxu0 0.0
    %934 = vmatprep.subr.mxu0 0.0
    %935 = vmatpush1.msra.mxu0 0.0
    %936 = vmatprep.subr.mxu0 0.0
    %937 = vmatpush1.msra.mxu0 0.0
    %938 = vmatprep.subr.mxu0 0.0
    %939 = vmatpush1.msra.mxu0 0.0
    %940 = vmatprep.subr.mxu0 0.0
    %941 = vmatpush1.msra.mxu0 0.0
    %942 = vmatprep.mubr.f32.mxu0 0.0
    %943 = vmatmul.mubr.f32.gmra.mrb[0].mxu0 %v876
    %v944 = vpop.f32.mrb[0].mxu0
    %v945 = vadd.f32 0.0, %v944
    %v946 = vpop.f32.mrb[0].mxu0
    %947 = vdwg.mxu0
    %948 = vst [vmem:[#allocation7] sm:$0xff] %v945
    %v949 = vld [vmem:[%s3] sm:$0xff]
    %v950 = vld [vmem:[%s3 + $0x8] sm:$0xff]
    %v951 = vld [vmem:[%s3 + $0x10] sm:$0xff]
    %v952 = vld [vmem:[%s3 + $0x18] sm:$0xff]
    %v953 = vld [vmem:[%s3 + $0x20] sm:$0xff]
    %v954 = vld [vmem:[%s3 + $0x28] sm:$0xff]
    %v955 = vld [vmem:[%s3 + $0x30] sm:$0xff]
    %v956 = vld [vmem:[%s3 + $0x38] sm:$0xff]
    %v957 = vld [vmem:[%s8] sm:$0xff]
    %v958 = vld [vmem:[%s8 + $0x8] sm:$0xff]
    %v959 = vld [vmem:[%s10] sm:$0x1]
    %v961 = vlaneseq
    %v962 = vshrl.u32 %v961, 7
    %v963 = vsub.s32 0, %v962
    %v964 = vrot.slane %v959, %v963
    %v967 = vsel %vm95, %v949, 0
    %v970 = vsel %vm95, %v950, 0
    %v973 = vsel %vm95, %v951, 0
    %v976 = vsel %vm95, %v952, 0
    %v979 = vsel %vm95, %v953, 0
    %v982 = vsel %vm95, %v954, 0
    %v985 = vsel %vm95, %v955, 0
    %v988 = vsel %vm95, %v956, 0
    %990 = vmatprep.subr.mxu0 0.0
    %991 = vmatpush1.msra.mxu0 %v957
    %992 = vmatprep.subr.mxu0 0.0
    %993 = vmatpush1.msra.mxu0 %v958
    %994 = vmatprep.subr.mxu0 0.0
    %995 = vmatpush1.msra.mxu0 0.0
    %996 = vmatprep.subr.mxu0 0.0
    %997 = vmatpush1.msra.mxu0 0.0
    %998 = vmatprep.subr.mxu0 0.0
    %999 = vmatpush1.msra.mxu0 0.0
    %1000 = vmatprep.subr.mxu0 0.0
    %1001 = vmatpush1.msra.mxu0 0.0
    %1002 = vmatprep.subr.mxu0 0.0
    %1003 = vmatpush1.msra.mxu0 0.0
    %1004 = vmatprep.subr.mxu0 0.0
    %1005 = vmatpush1.msra.mxu0 0.0
    %1006 = vmatprep.subr.mxu0 0.0
    %1007 = vmatpush1.msra.mxu0 0.0
    %1008 = vmatprep.subr.mxu0 0.0
    %1009 = vmatpush1.msra.mxu0 0.0
    %1010 = vmatprep.subr.mxu0 0.0
    %1011 = vmatpush1.msra.mxu0 0.0
    %1012 = vmatprep.subr.mxu0 0.0
    %1013 = vmatpush1.msra.mxu0 0.0
    %1014 = vmatprep.subr.mxu0 0.0
    %1015 = vmatpush1.msra.mxu0 0.0
    %1016 = vmatprep.subr.mxu0 0.0
    %1017 = vmatpush1.msra.mxu0 0.0
    %1018 = vmatprep.subr.mxu0 0.0
    %1019 = vmatpush1.msra.mxu0 0.0
    %1020 = vmatprep.subr.mxu0 0.0
    %1021 = vmatpush1.msra.mxu0 0.0
    %1022 = vmatprep.subr.mxu0 0.0
    %1023 = vmatpush1.msra.mxu0 0.0
    %1024 = vmatprep.subr.mxu0 0.0
    %1025 = vmatpush1.msra.mxu0 0.0
    %1026 = vmatprep.subr.mxu0 0.0
    %1027 = vmatpush1.msra.mxu0 0.0
    %1028 = vmatprep.subr.mxu0 0.0
    %1029 = vmatpush1.msra.mxu0 0.0
    %1030 = vmatprep.subr.mxu0 0.0
    %1031 = vmatpush1.msra.mxu0 0.0
    %1032 = vmatprep.subr.mxu0 0.0
    %1033 = vmatpush1.msra.mxu0 0.0
    %1034 = vmatprep.subr.mxu0 0.0
    %1035 = vmatpush1.msra.mxu0 0.0
    %1036 = vmatprep.subr.mxu0 0.0
    %1037 = vmatpush1.msra.mxu0 0.0
    %1038 = vmatprep.subr.mxu0 0.0
    %1039 = vmatpush1.msra.mxu0 0.0
    %1040 = vmatprep.subr.mxu0 0.0
    %1041 = vmatpush1.msra.mxu0 0.0
    %1042 = vmatprep.subr.mxu0 0.0
    %1043 = vmatpush1.msra.mxu0 0.0
    %1044 = vmatprep.subr.mxu0 0.0
    %1045 = vmatpush1.msra.mxu0 0.0
    %1046 = vmatprep.subr.mxu0 0.0
    %1047 = vmatpush1.msra.mxu0 0.0
    %1048 = vmatprep.subr.mxu0 0.0
    %1049 = vmatpush1.msra.mxu0 0.0
    %1050 = vmatprep.subr.mxu0 0.0
    %1051 = vmatpush1.msra.mxu0 0.0
    %1052 = vmatprep.subr.mxu0 0.0
    %1053 = vmatpush1.msra.mxu0 0.0
    %1054 = vmatprep.mubr.f32.mxu0 0.0
    %1055 = vmatmul.mubr.f32.gmra.mrb[0].mxu0 %v967
    %v1056 = vpop.f32.mrb[0].mxu0
    %v1057 = vadd.f32 %v964, %v1056
    %v1058 = vpop.f32.mrb[0].mxu0
    %1059 = vmatprep.mubr.f32.mxu0 0.0
    %1060 = vmatmul.mubr.f32.gmra.mrb[0].mxu0 %v970
    %v1061 = vpop.f32.mrb[0].mxu0
    %v1062 = vadd.f32 %v964, %v1061
    %v1063 = vpop.f32.mrb[0].mxu0
    %1064 = vmatprep.mubr.f32.mxu0 0.0
    %1065 = vmatmul.mubr.f32.gmra.mrb[0].mxu0 %v973
    %v1066 = vpop.f32.mrb[0].mxu0
    %v1067 = vadd.f32 %v964, %v1066
    %v1068 = vpop.f32.mrb[0].mxu0
    %1069 = vmatprep.mubr.f32.mxu0 0.0
    %1070 = vmatmul.mubr.f32.gmra.mrb[0].mxu0 %v976
    %v1071 = vpop.f32.mrb[0].mxu0
    %v1072 = vadd.f32 %v964, %v1071
    %v1073 = vpop.f32.mrb[0].mxu0
    %1074 = vmatprep.mubr.f32.mxu0 0.0
    %1075 = vmatmul.mubr.f32.gmra.mrb[0].mxu0 %v979
    %v1076 = vpop.f32.mrb[0].mxu0
    %v1077 = vadd.f32 %v964, %v1076
    %v1078 = vpop.f32.mrb[0].mxu0
    %1079 = vmatprep.mubr.f32.mxu0 0.0
    %1080 = vmatmul.mubr.f32.gmra.mrb[0].mxu0 %v982
    %v1081 = vpop.f32.mrb[0].mxu0
    %v1082 = vadd.f32 %v964, %v1081
    %v1083 = vpop.f32.mrb[0].mxu0
    %1084 = vmatprep.mubr.f32.mxu0 0.0
    %1085 = vmatmul.mubr.f32.gmra.mrb[0].mxu0 %v985
    %v1086 = vpop.f32.mrb[0].mxu0
    %v1087 = vadd.f32 %v964, %v1086
    %v1088 = vpop.f32.mrb[0].mxu0
    %1089 = vmatprep.mubr.f32.mxu0 0.0
    %1090 = vmatmul.mubr.f32.gmra.mrb[0].mxu0 %v988
    %v1091 = vpop.f32.mrb[0].mxu0
    %v1092 = vadd.f32 %v964, %v1091
    %v1093 = vpop.f32.mrb[0].mxu0
    %1094 = vdwg.mxu0
    %v1095 = vld [vmem:[#allocation2] sm:$0xff]
    %v1096 = vld [vmem:[#allocation2 + $0x8] sm:$0xff]
    %v1097 = vld [vmem:[#allocation2 + $0x10] sm:$0xff]
    %v1098 = vld [vmem:[#allocation2 + $0x18] sm:$0xff]
    %v1099 = vld [vmem:[#allocation2 + $0x20] sm:$0xff]
    %v1100 = vld [vmem:[#allocation2 + $0x28] sm:$0xff]
    %v1101 = vld [vmem:[#allocation2 + $0x30] sm:$0xff]
    %v1102 = vld [vmem:[#allocation2 + $0x38] sm:$0xff]
    %v1103 = vld [vmem:[#allocation2 + $0x40] sm:$0xff]
    %v1104 = vld [vmem:[#allocation2 + $0x48] sm:$0xff]
    %v1105 = vld [vmem:[#allocation2 + $0x50] sm:$0xff]
    %v1106 = vld [vmem:[#allocation2 + $0x58] sm:$0xff]
    %v1107 = vld [vmem:[#allocation2 + $0x60] sm:$0xff]
    %v1108 = vld [vmem:[#allocation2 + $0x68] sm:$0xff]
    %v1109 = vld [vmem:[#allocation2 + $0x70] sm:$0xff]
    %v1110 = vld [vmem:[#allocation2 + $0x78] sm:$0xff]
    %1111 = vmatprep.subr.mxu0 0.0
    %1112 = vmatpush1.msra.mxu0 %v1095
    %1113 = vmatprep.subr.mxu0 0.0
    %1114 = vmatpush1.msra.mxu0 %v1096
    %1115 = vmatprep.subr.mxu0 0.0
    %1116 = vmatpush1.msra.mxu0 %v1097
    %1117 = vmatprep.subr.mxu0 0.0
    %1118 = vmatpush1.msra.mxu0 %v1098
    %1119 = vmatprep.subr.mxu0 0.0
    %1120 = vmatpush1.msra.mxu0 %v1099
    %1121 = vmatprep.subr.mxu0 0.0
    %1122 = vmatpush1.msra.mxu0 %v1100
    %1123 = vmatprep.subr.mxu0 0.0
    %1124 = vmatpush1.msra.mxu0 %v1101
    %1125 = vmatprep.subr.mxu0 0.0
    %1126 = vmatpush1.msra.mxu0 %v1102
    %1127 = vmatprep.subr.mxu0 0.0
    %1128 = vmatpush1.msra.mxu0 %v1103
    %1129 = vmatprep.subr.mxu0 0.0
    %1130 = vmatpush1.msra.mxu0 %v1104
    %1131 = vmatprep.subr.mxu0 0.0
    %1132 = vmatpush1.msra.mxu0 %v1105
    %1133 = vmatprep.subr.mxu0 0.0
    %1134 = vmatpush1.msra.mxu0 %v1106
    %1135 = vmatprep.subr.mxu0 0.0
    %1136 = vmatpush1.msra.mxu0 %v1107
    %1137 = vmatprep.subr.mxu0 0.0
    %1138 = vmatpush1.msra.mxu0 %v1108
    %1139 = vmatprep.subr.mxu0 0.0
    %1140 = vmatpush1.msra.mxu0 %v1109
    %1141 = vmatprep.subr.mxu0 0.0
    %1142 = vmatpush1.msra.mxu0 %v1110
    %1143 = vmatprep.subr.mxu0 0.0
    %1144 = vmatpush1.msra.mxu0 0.0
    %1145 = vmatprep.subr.mxu0 0.0
    %1146 = vmatpush1.msra.mxu0 0.0
    %1147 = vmatprep.subr.mxu0 0.0
    %1148 = vmatpush1.msra.mxu0 0.0
    %1149 = vmatprep.subr.mxu0 0.0
    %1150 = vmatpush1.msra.mxu0 0.0
    %1151 = vmatprep.subr.mxu0 0.0
    %1152 = vmatpush1.msra.mxu0 0.0
    %1153 = vmatprep.subr.mxu0 0.0
    %1154 = vmatpush1.msra.mxu0 0.0
    %1155 = vmatprep.subr.mxu0 0.0
    %1156 = vmatpush1.msra.mxu0 0.0
    %1157 = vmatprep.subr.mxu0 0.0
    %1158 = vmatpush1.msra.mxu0 0.0
    %1159 = vmatprep.subr.mxu0 0.0
    %1160 = vmatpush1.msra.mxu0 0.0
    %1161 = vmatprep.subr.mxu0 0.0
    %1162 = vmatpush1.msra.mxu0 0.0
    %1163 = vmatprep.subr.mxu0 0.0
    %1164 = vmatpush1.msra.mxu0 0.0
    %1165 = vmatprep.subr.mxu0 0.0
    %1166 = vmatpush1.msra.mxu0 0.0
    %1167 = vmatprep.subr.mxu0 0.0
    %1168 = vmatpush1.msra.mxu0 0.0
    %1169 = vmatprep.subr.mxu0 0.0
    %1170 = vmatpush1.msra.mxu0 0.0
    %1171 = vmatprep.subr.mxu0 0.0
    %1172 = vmatpush1.msra.mxu0 0.0
    %1173 = vmatprep.subr.mxu0 0.0
    %1174 = vmatpush1.msra.mxu0 0.0
    %1175 = vmatprep.mubr.f32.mxu0 0.0
    %1176 = vmatmul.mubr.f32.gmra.mrb[0].mxu0 %v945
    %v1177 = vpop.f32.mrb[0].mxu0
    %v1178 = vadd.f32 0.0, %v1177
    %v1179 = vpop.f32.mrb[0].mxu0
    %1180 = vdwg.mxu0
    %v1181 = vadd.f32 %v1057, %v1178
    %v1182 = vtanh.pop %v1181
    %vm1183 = vcmp.gt.s32.totalorder %v77, 0
    %v1184 = vsel %vm1183, 1, 0
    %1185 = vset.pattern.permute.xlu0 0
    %1186 = vperm.xlu0 %1185, %v1184
    %v1187 = vpop.permute.xlu0 %1186
    %vm1188 = vcmp.eq.s32.totalorder %v1187, 1
    %v1189 = vsel %vm1188, %v1182, %v945
    %v1190 = vsel %vm1188, %v1182, 0.0
    %1191 = vmatprep.subr.mxu0 0.0
    %1192 = vmatpush1.msra.mxu0 %v1095
    %1193 = vmatprep.subr.mxu0 0.0
    %1194 = vmatpush1.msra.mxu0 %v1096
    %1195 = vmatprep.subr.mxu0 0.0
    %1196 = vmatpush1.msra.mxu0 %v1097
    %1197 = vmatprep.subr.mxu0 0.0
    %1198 = vmatpush1.msra.mxu0 %v1098
    %1199 = vmatprep.subr.mxu0 0.0
    %1200 = vmatpush1.msra.mxu0 %v1099
    %1201 = vmatprep.subr.mxu0 0.0
    %1202 = vmatpush1.msra.mxu0 %v1100
    %1203 = vmatprep.subr.mxu0 0.0
    %1204 = vmatpush1.msra.mxu0 %v1101
    %1205 = vmatprep.subr.mxu0 0.0
    %1206 = vmatpush1.msra.mxu0 %v1102
    %1207 = vmatprep.subr.mxu0 0.0
    %1208 = vmatpush1.msra.mxu0 %v1103
    %1209 = vmatprep.subr.mxu0 0.0
    %1210 = vmatpush1.msra.mxu0 %v1104
    %1211 = vmatprep.subr.mxu0 0.0
    %1212 = vmatpush1.msra.mxu0 %v1105
    %1213 = vmatprep.subr.mxu0 0.0
    %1214 = vmatpush1.msra.mxu0 %v1106
    %1215 = vmatprep.subr.mxu0 0.0
    %1216 = vmatpush1.msra.mxu0 %v1107
    %1217 = vmatprep.subr.mxu0 0.0
    %1218 = vmatpush1.msra.mxu0 %v1108
    %1219 = vmatprep.subr.mxu0 0.0
    %1220 = vmatpush1.msra.mxu0 %v1109
    %1221 = vmatprep.subr.mxu0 0.0
    %1222 = vmatpush1.msra.mxu0 %v1110
    %1223 = vmatprep.subr.mxu0 0.0
    %1224 = vmatpush1.msra.mxu0 0.0
    %1225 = vmatprep.subr.mxu0 0.0
    %1226 = vmatpush1.msra.mxu0 0.0
    %1227 = vmatprep.subr.mxu0 0.0
    %1228 = vmatpush1.msra.mxu0 0.0
    %1229 = vmatprep.subr.mxu0 0.0
    %1230 = vmatpush1.msra.mxu0 0.0
    %1231 = vmatprep.subr.mxu0 0.0
    %1232 = vmatpush1.msra.mxu0 0.0
    %1233 = vmatprep.subr.mxu0 0.0
    %1234 = vmatpush1.msra.mxu0 0.0
    %1235 = vmatprep.subr.mxu0 0.0
    %1236 = vmatpush1.msra.mxu0 0.0
    %1237 = vmatprep.subr.mxu0 0.0
    %1238 = vmatpush1.msra.mxu0 0.0
    %1239 = vmatprep.subr.mxu0 0.0
    %1240 = vmatpush1.msra.mxu0 0.0
    %1241 = vmatprep.subr.mxu0 0.0
    %1242 = vmatpush1.msra.mxu0 0.0
    %1243 = vmatprep.subr.mxu0 0.0
    %1244 = vmatpush1.msra.mxu0 0.0
    %1245 = vmatprep.subr.mxu0 0.0
    %1246 = vmatpush1.msra.mxu0 0.0
    %1247 = vmatprep.subr.mxu0 0.0
    %1248 = vmatpush1.msra.mxu0 0.0
    %1249 = vmatprep.subr.mxu0 0.0
    %1250 = vmatpush1.msra.mxu0 0.0
    %1251 = vmatprep.subr.mxu0 0.0
    %1252 = vmatpush1.msra.mxu0 0.0
    %1253 = vmatprep.subr.mxu0 0.0
    %1254 = vmatpush1.msra.mxu0 0.0
    %1255 = vmatprep.mubr.f32.mxu0 0.0
    %1256 = vmatmul.mubr.f32.gmra.mrb[0].mxu0 %v1189
    %v1257 = vpop.f32.mrb[0].mxu0
    %v1258 = vadd.f32 0.0, %v1257
    %v1259 = vpop.f32.mrb[0].mxu0
    %1260 = vdwg.mxu0
    %v1261 = vadd.f32 %v1062, %v1258
    %v1262 = vtanh.pop %v1261
    %vm1263 = vcmp.gt.s32.totalorder %v77, 1
    %v1264 = vsel %vm1263, 1, 0
    %1265 = vset.pattern.permute.xlu0 0
    %1266 = vperm.xlu0 %1265, %v1264
    %v1267 = vpop.permute.xlu0 %1266
    %vm1268 = vcmp.eq.s32.totalorder %v1267, 1
    %v1269 = vsel %vm1268, %v1262, %v1189
    %v1270 = vsel %vm1268, %v1262, 0.0
    %1271 = vmatprep.subr.mxu0 0.0
    %1272 = vmatpush1.msra.mxu0 %v1095
    %1273 = vmatprep.subr.mxu0 0.0
    %1274 = vmatpush1.msra.mxu0 %v1096
    %1275 = vmatprep.subr.mxu0 0.0
    %1276 = vmatpush1.msra.mxu0 %v1097
    %1277 = vmatprep.subr.mxu0 0.0
    %1278 = vmatpush1.msra.mxu0 %v1098
    %1279 = vmatprep.subr.mxu0 0.0
    %1280 = vmatpush1.msra.mxu0 %v1099
    %1281 = vmatprep.subr.mxu0 0.0
    %1282 = vmatpush1.msra.mxu0 %v1100
    %1283 = vmatprep.subr.mxu0 0.0
    %1284 = vmatpush1.msra.mxu0 %v1101
    %1285 = vmatprep.subr.mxu0 0.0
    %1286 = vmatpush1.msra.mxu0 %v1102
    %1287 = vmatprep.subr.mxu0 0.0
    %1288 = vmatpush1.msra.mxu0 %v1103
    %1289 = vmatprep.subr.mxu0 0.0
    %1290 = vmatpush1.msra.mxu0 %v1104
    %1291 = vmatprep.subr.mxu0 0.0
    %1292 = vmatpush1.msra.mxu0 %v1105
    %1293 = vmatprep.subr.mxu0 0.0
    %1294 = vmatpush1.msra.mxu0 %v1106
    %1295 = vmatprep.subr.mxu0 0.0
    %1296 = vmatpush1.msra.mxu0 %v1107
    %1297 = vmatprep.subr.mxu0 0.0
    %1298 = vmatpush1.msra.mxu0 %v1108
    %1299 = vmatprep.subr.mxu0 0.0
    %1300 = vmatpush1.msra.mxu0 %v1109
    %1301 = vmatprep.subr.mxu0 0.0
    %1302 = vmatpush1.msra.mxu0 %v1110
    %1303 = vmatprep.subr.mxu0 0.0
    %1304 = vmatpush1.msra.mxu0 0.0
    %1305 = vmatprep.subr.mxu0 0.0
    %1306 = vmatpush1.msra.mxu0 0.0
    %1307 = vmatprep.subr.mxu0 0.0
    %1308 = vmatpush1.msra.mxu0 0.0
    %1309 = vmatprep.subr.mxu0 0.0
    %1310 = vmatpush1.msra.mxu0 0.0
    %1311 = vmatprep.subr.mxu0 0.0
    %1312 = vmatpush1.msra.mxu0 0.0
    %1313 = vmatprep.subr.mxu0 0.0
    %1314 = vmatpush1.msra.mxu0 0.0
    %1315 = vmatprep.subr.mxu0 0.0
    %1316 = vmatpush1.msra.mxu0 0.0
    %1317 = vmatprep.subr.mxu0 0.0
    %1318 = vmatpush1.msra.mxu0 0.0
    %1319 = vmatprep.subr.mxu0 0.0
    %1320 = vmatpush1.msra.mxu0 0.0
    %1321 = vmatprep.subr.mxu0 0.0
    %1322 = vmatpush1.msra.mxu0 0.0
    %1323 = vmatprep.subr.mxu0 0.0
    %1324 = vmatpush1.msra.mxu0 0.0
    %1325 = vmatprep.subr.mxu0 0.0
    %1326 = vmatpush1.msra.mxu0 0.0
    %1327 = vmatprep.subr.mxu0 0.0
    %1328 = vmatpush1.msra.mxu0 0.0
    %1329 = vmatprep.subr.mxu0 0.0
    %1330 = vmatpush1.msra.mxu0 0.0
    %1331 = vmatprep.subr.mxu0 0.0
    %1332 = vmatpush1.msra.mxu0 0.0
    %1333 = vmatprep.subr.mxu0 0.0
    %1334 = vmatpush1.msra.mxu0 0.0
    %1335 = vmatprep.mubr.f32.mxu0 0.0
    %1336 = vmatmul.mubr.f32.gmra.mrb[0].mxu0 %v1269
    %v1337 = vpop.f32.mrb[0].mxu0
    %v1338 = vadd.f32 0.0, %v1337
    %v1339 = vpop.f32.mrb[0].mxu0
    %1340 = vdwg.mxu0
    %v1341 = vadd.f32 %v1067, %v1338
    %v1342 = vtanh.pop %v1341
    %vm1343 = vcmp.gt.s32.totalorder %v77, 2
    %v1344 = vsel %vm1343, 1, 0
    %1345 = vset.pattern.permute.xlu0 0
    %1346 = vperm.xlu0 %1345, %v1344
    %v1347 = vpop.permute.xlu0 %1346
    %vm1348 = vcmp.eq.s32.totalorder %v1347, 1
    %v1349 = vsel %vm1348, %v1342, %v1269
    %v1350 = vsel %vm1348, %v1342, 0.0
    %1351 = vmatprep.subr.mxu0 0.0
    %1352 = vmatpush1.msra.mxu0 %v1095
    %1353 = vmatprep.subr.mxu0 0.0
    %1354 = vmatpush1.msra.mxu0 %v1096
    %1355 = vmatprep.subr.mxu0 0.0
    %1356 = vmatpush1.msra.mxu0 %v1097
    %1357 = vmatprep.subr.mxu0 0.0
    %1358 = vmatpush1.msra.mxu0 %v1098
    %1359 = vmatprep.subr.mxu0 0.0
    %1360 = vmatpush1.msra.mxu0 %v1099
    %1361 = vmatprep.subr.mxu0 0.0
    %1362 = vmatpush1.msra.mxu0 %v1100
    %1363 = vmatprep.subr.mxu0 0.0
    %1364 = vmatpush1.msra.mxu0 %v1101
    %1365 = vmatprep.subr.mxu0 0.0
    %1366 = vmatpush1.msra.mxu0 %v1102
    %1367 = vmatprep.subr.mxu0 0.0
    %1368 = vmatpush1.msra.mxu0 %v1103
    %1369 = vmatprep.subr.mxu0 0.0
    %1370 = vmatpush1.msra.mxu0 %v1104
    %1371 = vmatprep.subr.mxu0 0.0
    %1372 = vmatpush1.msra.mxu0 %v1105
    %1373 = vmatprep.subr.mxu0 0.0
    %1374 = vmatpush1.msra.mxu0 %v1106
    %1375 = vmatprep.subr.mxu0 0.0
    %1376 = vmatpush1.msra.mxu0 %v1107
    %1377 = vmatprep.subr.mxu0 0.0
    %1378 = vmatpush1.msra.mxu0 %v1108
    %1379 = vmatprep.subr.mxu0 0.0
    %1380 = vmatpush1.msra.mxu0 %v1109
    %1381 = vmatprep.subr.mxu0 0.0
    %1382 = vmatpush1.msra.mxu0 %v1110
    %1383 = vmatprep.subr.mxu0 0.0
    %1384 = vmatpush1.msra.mxu0 0.0
    %1385 = vmatprep.subr.mxu0 0.0
    %1386 = vmatpush1.msra.mxu0 0.0
    %1387 = vmatprep.subr.mxu0 0.0
    %1388 = vmatpush1.msra.mxu0 0.0
    %1389 = vmatprep.subr.mxu0 0.0
    %1390 = vmatpush1.msra.mxu0 0.0
    %1391 = vmatprep.subr.mxu0 0.0
    %1392 = vmatpush1.msra.mxu0 0.0
    %1393 = vmatprep.subr.mxu0 0.0
    %1394 = vmatpush1.msra.mxu0 0.0
    %1395 = vmatprep.subr.mxu0 0.0
    %1396 = vmatpush1.msra.mxu0 0.0
    %1397 = vmatprep.subr.mxu0 0.0
    %1398 = vmatpush1.msra.mxu0 0.0
    %1399 = vmatprep.subr.mxu0 0.0
    %1400 = vmatpush1.msra.mxu0 0.0
    %1401 = vmatprep.subr.mxu0 0.0
    %1402 = vmatpush1.msra.mxu0 0.0
    %1403 = vmatprep.subr.mxu0 0.0
    %1404 = vmatpush1.msra.mxu0 0.0
    %1405 = vmatprep.subr.mxu0 0.0
    %1406 = vmatpush1.msra.mxu0 0.0
    %1407 = vmatprep.subr.mxu0 0.0
    %1408 = vmatpush1.msra.mxu0 0.0
    %1409 = vmatprep.subr.mxu0 0.0
    %1410 = vmatpush1.msra.mxu0 0.0
    %1411 = vmatprep.subr.mxu0 0.0
    %1412 = vmatpush1.msra.mxu0 0.0
    %1413 = vmatprep.subr.mxu0 0.0
    %1414 = vmatpush1.msra.mxu0 0.0
    %1415 = vmatprep.mubr.f32.mxu0 0.0
    %1416 = vmatmul.mubr.f32.gmra.mrb[0].mxu0 %v1349
    %v1417 = vpop.f32.mrb[0].mxu0
    %v1418 = vadd.f32 0.0, %v1417
    %v1419 = vpop.f32.mrb[0].mxu0
    %1420 = vdwg.mxu0
    %v1421 = vadd.f32 %v1072, %v1418
    %v1422 = vtanh.pop %v1421
    %vm1423 = vcmp.gt.s32.totalorder %v77, 3
    %v1424 = vsel %vm1423, 1, 0
    %1425 = vset.pattern.permute.xlu0 0
    %1426 = vperm.xlu0 %1425, %v1424
    %v1427 = vpop.permute.xlu0 %1426
    %vm1428 = vcmp.eq.s32.totalorder %v1427, 1
    %v1429 = vsel %vm1428, %v1422, %v1349
    %v1430 = vsel %vm1428, %v1422, 0.0
    %1431 = vmatprep.subr.mxu0 0.0
    %1432 = vmatpush1.msra.mxu0 %v1095
    %1433 = vmatprep.subr.mxu0 0.0
    %1434 = vmatpush1.msra.mxu0 %v1096
    %1435 = vmatprep.subr.mxu0 0.0
    %1436 = vmatpush1.msra.mxu0 %v1097
    %1437 = vmatprep.subr.mxu0 0.0
    %1438 = vmatpush1.msra.mxu0 %v1098
    %1439 = vmatprep.subr.mxu0 0.0
    %1440 = vmatpush1.msra.mxu0 %v1099
    %1441 = vmatprep.subr.mxu0 0.0
    %1442 = vmatpush1.msra.mxu0 %v1100
    %1443 = vmatprep.subr.mxu0 0.0
    %1444 = vmatpush1.msra.mxu0 %v1101
    %1445 = vmatprep.subr.mxu0 0.0
    %1446 = vmatpush1.msra.mxu0 %v1102
    %1447 = vmatprep.subr.mxu0 0.0
    %1448 = vmatpush1.msra.mxu0 %v1103
    %1449 = vmatprep.subr.mxu0 0.0
    %1450 = vmatpush1.msra.mxu0 %v1104
    %1451 = vmatprep.subr.mxu0 0.0
    %1452 = vmatpush1.msra.mxu0 %v1105
    %1453 = vmatprep.subr.mxu0 0.0
    %1454 = vmatpush1.msra.mxu0 %v1106
    %1455 = vmatprep.subr.mxu0 0.0
    %1456 = vmatpush1.msra.mxu0 %v1107
    %1457 = vmatprep.subr.mxu0 0.0
    %1458 = vmatpush1.msra.mxu0 %v1108
    %1459 = vmatprep.subr.mxu0 0.0
    %1460 = vmatpush1.msra.mxu0 %v1109
    %1461 = vmatprep.subr.mxu0 0.0
    %1462 = vmatpush1.msra.mxu0 %v1110
    %1463 = vmatprep.subr.mxu0 0.0
    %1464 = vmatpush1.msra.mxu0 0.0
    %1465 = vmatprep.subr.mxu0 0.0
    %1466 = vmatpush1.msra.mxu0 0.0
    %1467 = vmatprep.subr.mxu0 0.0
    %1468 = vmatpush1.msra.mxu0 0.0
    %1469 = vmatprep.subr.mxu0 0.0
    %1470 = vmatpush1.msra.mxu0 0.0
    %1471 = vmatprep.subr.mxu0 0.0
    %1472 = vmatpush1.msra.mxu0 0.0
    %1473 = vmatprep.subr.mxu0 0.0
    %1474 = vmatpush1.msra.mxu0 0.0
    %1475 = vmatprep.subr.mxu0 0.0
    %1476 = vmatpush1.msra.mxu0 0.0
    %1477 = vmatprep.subr.mxu0 0.0
    %1478 = vmatpush1.msra.mxu0 0.0
    %1479 = vmatprep.subr.mxu0 0.0
    %1480 = vmatpush1.msra.mxu0 0.0
    %1481 = vmatprep.subr.mxu0 0.0
    %1482 = vmatpush1.msra.mxu0 0.0
    %1483 = vmatprep.subr.mxu0 0.0
    %1484 = vmatpush1.msra.mxu0 0.0
    %1485 = vmatprep.subr.mxu0 0.0
    %1486 = vmatpush1.msra.mxu0 0.0
    %1487 = vmatprep.subr.mxu0 0.0
    %1488 = vmatpush1.msra.mxu0 0.0
    %1489 = vmatprep.subr.mxu0 0.0
    %1490 = vmatpush1.msra.mxu0 0.0
    %1491 = vmatprep.subr.mxu0 0.0
    %1492 = vmatpush1.msra.mxu0 0.0
    %1493 = vmatprep.subr.mxu0 0.0
    %1494 = vmatpush1.msra.mxu0 0.0
    %1495 = vmatprep.mubr.f32.mxu0 0.0
    %1496 = vmatmul.mubr.f32.gmra.mrb[0].mxu0 %v1429
    %v1497 = vpop.f32.mrb[0].mxu0
    %v1498 = vadd.f32 0.0, %v1497
    %v1499 = vpop.f32.mrb[0].mxu0
    %1500 = vdwg.mxu0
    %v1501 = vadd.f32 %v1077, %v1498
    %v1502 = vtanh.pop %v1501
    %vm1503 = vcmp.gt.s32.totalorder %v77, 4
    %v1504 = vsel %vm1503, 1, 0
    %1505 = vset.pattern.permute.xlu0 0
    %1506 = vperm.xlu0 %1505, %v1504
    %v1507 = vpop.permute.xlu0 %1506
    %vm1508 = vcmp.eq.s32.totalorder %v1507, 1
    %v1509 = vsel %vm1508, %v1502, %v1429
    %v1510 = vsel %vm1508, %v1502, 0.0
    %1511 = vmatprep.subr.mxu0 0.0
    %1512 = vmatpush1.msra.mxu0 %v1095
    %1513 = vmatprep.subr.mxu0 0.0
    %1514 = vmatpush1.msra.mxu0 %v1096
    %1515 = vmatprep.subr.mxu0 0.0
    %1516 = vmatpush1.msra.mxu0 %v1097
    %1517 = vmatprep.subr.mxu0 0.0
    %1518 = vmatpush1.msra.mxu0 %v1098
    %1519 = vmatprep.subr.mxu0 0.0
    %1520 = vmatpush1.msra.mxu0 %v1099
    %1521 = vmatprep.subr.mxu0 0.0
    %1522 = vmatpush1.msra.mxu0 %v1100
    %1523 = vmatprep.subr.mxu0 0.0
    %1524 = vmatpush1.msra.mxu0 %v1101
    %1525 = vmatprep.subr.mxu0 0.0
    %1526 = vmatpush1.msra.mxu0 %v1102
    %1527 = vmatprep.subr.mxu0 0.0
    %1528 = vmatpush1.msra.mxu0 %v1103
    %1529 = vmatprep.subr.mxu0 0.0
    %1530 = vmatpush1.msra.mxu0 %v1104
    %1531 = vmatprep.subr.mxu0 0.0
    %1532 = vmatpush1.msra.mxu0 %v1105
    %1533 = vmatprep.subr.mxu0 0.0
    %1534 = vmatpush1.msra.mxu0 %v1106
    %1535 = vmatprep.subr.mxu0 0.0
    %1536 = vmatpush1.msra.mxu0 %v1107
    %1537 = vmatprep.subr.mxu0 0.0
    %1538 = vmatpush1.msra.mxu0 %v1108
    %1539 = vmatprep.subr.mxu0 0.0
    %1540 = vmatpush1.msra.mxu0 %v1109
    %1541 = vmatprep.subr.mxu0 0.0
    %1542 = vmatpush1.msra.mxu0 %v1110
    %1543 = vmatprep.subr.mxu0 0.0
    %1544 = vmatpush1.msra.mxu0 0.0
    %1545 = vmatprep.subr.mxu0 0.0
    %1546 = vmatpush1.msra.mxu0 0.0
    %1547 = vmatprep.subr.mxu0 0.0
    %1548 = vmatpush1.msra.mxu0 0.0
    %1549 = vmatprep.subr.mxu0 0.0
    %1550 = vmatpush1.msra.mxu0 0.0
    %1551 = vmatprep.subr.mxu0 0.0
    %1552 = vmatpush1.msra.mxu0 0.0
    %1553 = vmatprep.subr.mxu0 0.0
    %1554 = vmatpush1.msra.mxu0 0.0
    %1555 = vmatprep.subr.mxu0 0.0
    %1556 = vmatpush1.msra.mxu0 0.0
    %1557 = vmatprep.subr.mxu0 0.0
    %1558 = vmatpush1.msra.mxu0 0.0
    %1559 = vmatprep.subr.mxu0 0.0
    %1560 = vmatpush1.msra.mxu0 0.0
    %1561 = vmatprep.subr.mxu0 0.0
    %1562 = vmatpush1.msra.mxu0 0.0
    %1563 = vmatprep.subr.mxu0 0.0
    %1564 = vmatpush1.msra.mxu0 0.0
    %1565 = vmatprep.subr.mxu0 0.0
    %1566 = vmatpush1.msra.mxu0 0.0
    %1567 = vmatprep.subr.mxu0 0.0
    %1568 = vmatpush1.msra.mxu0 0.0
    %1569 = vmatprep.subr.mxu0 0.0
    %1570 = vmatpush1.msra.mxu0 0.0
    %1571 = vmatprep.subr.mxu0 0.0
    %1572 = vmatpush1.msra.mxu0 0.0
    %1573 = vmatprep.subr.mxu0 0.0
    %1574 = vmatpush1.msra.mxu0 0.0
    %1575 = vmatprep.mubr.f32.mxu0 0.0
    %1576 = vmatmul.mubr.f32.gmra.mrb[0].mxu0 %v1509
    %v1577 = vpop.f32.mrb[0].mxu0
    %v1578 = vadd.f32 0.0, %v1577
    %v1579 = vpop.f32.mrb[0].mxu0
    %1580 = vdwg.mxu0
    %v1581 = vadd.f32 %v1082, %v1578
    %v1582 = vtanh.pop %v1581
    %vm1583 = vcmp.gt.s32.totalorder %v77, 5
    %v1584 = vsel %vm1583, 1, 0
    %1585 = vset.pattern.permute.xlu0 0
    %1586 = vperm.xlu0 %1585, %v1584
    %v1587 = vpop.permute.xlu0 %1586
    %vm1588 = vcmp.eq.s32.totalorder %v1587, 1
    %v1589 = vsel %vm1588, %v1582, %v1509
    %v1590 = vsel %vm1588, %v1582, 0.0
    %1591 = vmatprep.subr.mxu0 0.0
    %1592 = vmatpush1.msra.mxu0 %v1095
    %1593 = vmatprep.subr.mxu0 0.0
    %1594 = vmatpush1.msra.mxu0 %v1096
    %1595 = vmatprep.subr.mxu0 0.0
    %1596 = vmatpush1.msra.mxu0 %v1097
    %1597 = vmatprep.subr.mxu0 0.0
    %1598 = vmatpush1.msra.mxu0 %v1098
    %1599 = vmatprep.subr.mxu0 0.0
    %1600 = vmatpush1.msra.mxu0 %v1099
    %1601 = vmatprep.subr.mxu0 0.0
    %1602 = vmatpush1.msra.mxu0 %v1100
    %1603 = vmatprep.subr.mxu0 0.0
    %1604 = vmatpush1.msra.mxu0 %v1101
    %1605 = vmatprep.subr.mxu0 0.0
    %1606 = vmatpush1.msra.mxu0 %v1102
    %1607 = vmatprep.subr.mxu0 0.0
    %1608 = vmatpush1.msra.mxu0 %v1103
    %1609 = vmatprep.subr.mxu0 0.0
    %1610 = vmatpush1.msra.mxu0 %v1104
    %1611 = vmatprep.subr.mxu0 0.0
    %1612 = vmatpush1.msra.mxu0 %v1105
    %1613 = vmatprep.subr.mxu0 0.0
    %1614 = vmatpush1.msra.mxu0 %v1106
    %1615 = vmatprep.subr.mxu0 0.0
    %1616 = vmatpush1.msra.mxu0 %v1107
    %1617 = vmatprep.subr.mxu0 0.0
    %1618 = vmatpush1.msra.mxu0 %v1108
    %1619 = vmatprep.subr.mxu0 0.0
    %1620 = vmatpush1.msra.mxu0 %v1109
    %1621 = vmatprep.subr.mxu0 0.0
    %1622 = vmatpush1.msra.mxu0 %v1110
    %1623 = vmatprep.subr.mxu0 0.0
    %1624 = vmatpush1.msra.mxu0 0.0
    %1625 = vmatprep.subr.mxu0 0.0
    %1626 = vmatpush1.msra.mxu0 0.0
    %1627 = vmatprep.subr.mxu0 0.0
    %1628 = vmatpush1.msra.mxu0 0.0
    %1629 = vmatprep.subr.mxu0 0.0
    %1630 = vmatpush1.msra.mxu0 0.0
    %1631 = vmatprep.subr.mxu0 0.0
    %1632 = vmatpush1.msra.mxu0 0.0
    %1633 = vmatprep.subr.mxu0 0.0
    %1634 = vmatpush1.msra.mxu0 0.0
    %1635 = vmatprep.subr.mxu0 0.0
    %1636 = vmatpush1.msra.mxu0 0.0
    %1637 = vmatprep.subr.mxu0 0.0
    %1638 = vmatpush1.msra.mxu0 0.0
    %1639 = vmatprep.subr.mxu0 0.0
    %1640 = vmatpush1.msra.mxu0 0.0
    %1641 = vmatprep.subr.mxu0 0.0
    %1642 = vmatpush1.msra.mxu0 0.0
    %1643 = vmatprep.subr.mxu0 0.0
    %1644 = vmatpush1.msra.mxu0 0.0
    %1645 = vmatprep.subr.mxu0 0.0
    %1646 = vmatpush1.msra.mxu0 0.0
    %1647 = vmatprep.subr.mxu0 0.0
    %1648 = vmatpush1.msra.mxu0 0.0
    %1649 = vmatprep.subr.mxu0 0.0
    %1650 = vmatpush1.msra.mxu0 0.0
    %1651 = vmatprep.subr.mxu0 0.0
    %1652 = vmatpush1.msra.mxu0 0.0
    %1653 = vmatprep.subr.mxu0 0.0
    %1654 = vmatpush1.msra.mxu0 0.0
    %1655 = vmatprep.mubr.f32.mxu0 0.0
    %1656 = vmatmul.mubr.f32.gmra.mrb[0].mxu0 %v1589
    %v1657 = vpop.f32.mrb[0].mxu0
    %v1658 = vadd.f32 0.0, %v1657
    %v1659 = vpop.f32.mrb[0].mxu0
    %1660 = vdwg.mxu0
    %v1661 = vadd.f32 %v1087, %v1658
    %v1662 = vtanh.pop %v1661
    %vm1663 = vcmp.gt.s32.totalorder %v77, 6
    %v1664 = vsel %vm1663, 1, 0
    %1665 = vset.pattern.permute.xlu0 0
    %1666 = vperm.xlu0 %1665, %v1664
    %v1667 = vpop.permute.xlu0 %1666
    %vm1668 = vcmp.eq.s32.totalorder %v1667, 1
    %v1669 = vsel %vm1668, %v1662, %v1589
    %v1670 = vsel %vm1668, %v1662, 0.0
    %1671 = vmatprep.subr.mxu0 0.0
    %1672 = vmatpush1.msra.mxu0 %v1095
    %1673 = vmatprep.subr.mxu0 0.0
    %1674 = vmatpush1.msra.mxu0 %v1096
    %1675 = vmatprep.subr.mxu0 0.0
    %1676 = vmatpush1.msra.mxu0 %v1097
    %1677 = vmatprep.subr.mxu0 0.0
    %1678 = vmatpush1.msra.mxu0 %v1098
    %1679 = vmatprep.subr.mxu0 0.0
    %1680 = vmatpush1.msra.mxu0 %v1099
    %1681 = vmatprep.subr.mxu0 0.0
    %1682 = vmatpush1.msra.mxu0 %v1100
    %1683 = vmatprep.subr.mxu0 0.0
    %1684 = vmatpush1.msra.mxu0 %v1101
    %1685 = vmatprep.subr.mxu0 0.0
    %1686 = vmatpush1.msra.mxu0 %v1102
    %1687 = vmatprep.subr.mxu0 0.0
    %1688 = vmatpush1.msra.mxu0 %v1103
    %1689 = vmatprep.subr.mxu0 0.0
    %1690 = vmatpush1.msra.mxu0 %v1104
    %1691 = vmatprep.subr.mxu0 0.0
    %1692 = vmatpush1.msra.mxu0 %v1105
    %1693 = vmatprep.subr.mxu0 0.0
    %1694 = vmatpush1.msra.mxu0 %v1106
    %1695 = vmatprep.subr.mxu0 0.0
    %1696 = vmatpush1.msra.mxu0 %v1107
    %1697 = vmatprep.subr.mxu0 0.0
    %1698 = vmatpush1.msra.mxu0 %v1108
    %1699 = vmatprep.subr.mxu0 0.0
    %1700 = vmatpush1.msra.mxu0 %v1109
    %1701 = vmatprep.subr.mxu0 0.0
    %1702 = vmatpush1.msra.mxu0 %v1110
    %1703 = vmatprep.subr.mxu0 0.0
    %1704 = vmatpush1.msra.mxu0 0.0
    %1705 = vmatprep.subr.mxu0 0.0
    %1706 = vmatpush1.msra.mxu0 0.0
    %1707 = vmatprep.subr.mxu0 0.0
    %1708 = vmatpush1.msra.mxu0 0.0
    %1709 = vmatprep.subr.mxu0 0.0
    %1710 = vmatpush1.msra.mxu0 0.0
    %1711 = vmatprep.subr.mxu0 0.0
    %1712 = vmatpush1.msra.mxu0 0.0
    %1713 = vmatprep.subr.mxu0 0.0
    %1714 = vmatpush1.msra.mxu0 0.0
    %1715 = vmatprep.subr.mxu0 0.0
    %1716 = vmatpush1.msra.mxu0 0.0
    %1717 = vmatprep.subr.mxu0 0.0
    %1718 = vmatpush1.msra.mxu0 0.0
    %1719 = vmatprep.subr.mxu0 0.0
    %1720 = vmatpush1.msra.mxu0 0.0
    %1721 = vmatprep.subr.mxu0 0.0
    %1722 = vmatpush1.msra.mxu0 0.0
    %1723 = vmatprep.subr.mxu0 0.0
    %1724 = vmatpush1.msra.mxu0 0.0
    %1725 = vmatprep.subr.mxu0 0.0
    %1726 = vmatpush1.msra.mxu0 0.0
    %1727 = vmatprep.subr.mxu0 0.0
    %1728 = vmatpush1.msra.mxu0 0.0
    %1729 = vmatprep.subr.mxu0 0.0
    %1730 = vmatpush1.msra.mxu0 0.0
    %1731 = vmatprep.subr.mxu0 0.0
    %1732 = vmatpush1.msra.mxu0 0.0
    %1733 = vmatprep.subr.mxu0 0.0
    %1734 = vmatpush1.msra.mxu0 0.0
    %1735 = vmatprep.mubr.f32.mxu0 0.0
    %1736 = vmatmul.mubr.f32.gmra.mrb[0].mxu0 %v1669
    %v1737 = vpop.f32.mrb[0].mxu0
    %v1738 = vadd.f32 0.0, %v1737
    %v1739 = vpop.f32.mrb[0].mxu0
    %1740 = vdwg.mxu0
    %v1741 = vadd.f32 %v1092, %v1738
    %v1742 = vtanh.pop %v1741
    %vm1743 = vcmp.gt.s32.totalorder %v77, 7
    %v1744 = vsel %vm1743, 1, 0
    %1745 = vset.pattern.permute.xlu0 0
    %1746 = vperm.xlu0 %1745, %v1744
    %v1747 = vpop.permute.xlu0 %1746
    %vm1748 = vcmp.eq.s32.totalorder %v1747, 1
    %v1749 = vsel %vm1748, %v1742, 0.0
    %v1750 = vld [vmem:[#allocation5] sm:$0xff]
    %v1751 = vld [vmem:[#allocation5 + $0x8] sm:$0xff]
    %v1752 = vld [vmem:[#allocation5 + $0x10] sm:$0xff]
    %v1753 = vld [vmem:[#allocation5 + $0x18] sm:$0xff]
    %v1754 = vld [vmem:[#allocation5 + $0x20] sm:$0xff]
    %v1755 = vld [vmem:[#allocation5 + $0x28] sm:$0xff]
    %v1756 = vld [vmem:[#allocation5 + $0x30] sm:$0xff]
    %v1757 = vld [vmem:[#allocation5 + $0x38] sm:$0xff]
    %v1758 = vld [vmem:[#allocation5 + $0x40] sm:$0xff]
    %v1759 = vld [vmem:[#allocation5 + $0x48] sm:$0xff]
    %v1760 = vld [vmem:[#allocation5 + $0x50] sm:$0xff]
    %v1761 = vld [vmem:[#allocation5 + $0x58] sm:$0xff]
    %v1762 = vld [vmem:[#allocation5 + $0x60] sm:$0xff]
    %v1763 = vld [vmem:[#allocation5 + $0x68] sm:$0xff]
    %v1764 = vld [vmem:[#allocation5 + $0x70] sm:$0xff]
    %v1765 = vld [vmem:[#allocation5 + $0x78] sm:$0xff]
    %v1766 = vld [vmem:[%s12] sm:$0x1]
    %v1768 = vlaneseq
    %v1769 = vshrl.u32 %v1768, 7
    %v1770 = vsub.s32 0, %v1769
    %v1771 = vrot.slane %v1766, %v1770
    %1773 = vmatprep.subr.mxu0 0.0
    %1774 = vmatpush1.msra.mxu0 %v1750
    %1775 = vmatprep.subr.mxu0 0.0
    %1776 = vmatpush1.msra.mxu0 %v1751
    %1777 = vmatprep.subr.mxu0 0.0
    %1778 = vmatpush1.msra.mxu0 %v1752
    %1779 = vmatprep.subr.mxu0 0.0
    %1780 = vmatpush1.msra.mxu0 %v1753
    %1781 = vmatprep.subr.mxu0 0.0
    %1782 = vmatpush1.msra.mxu0 %v1754
    %1783 = vmatprep.subr.mxu0 0.0
    %1784 = vmatpush1.msra.mxu0 %v1755
    %1785 = vmatprep.subr.mxu0 0.0
    %1786 = vmatpush1.msra.mxu0 %v1756
    %1787 = vmatprep.subr.mxu0 0.0
    %1788 = vmatpush1.msra.mxu0 %v1757
    %1789 = vmatprep.subr.mxu0 0.0
    %1790 = vmatpush1.msra.mxu0 %v1758
    %1791 = vmatprep.subr.mxu0 0.0
    %1792 = vmatpush1.msra.mxu0 %v1759
    %1793 = vmatprep.subr.mxu0 0.0
    %1794 = vmatpush1.msra.mxu0 %v1760
    %1795 = vmatprep.subr.mxu0 0.0
    %1796 = vmatpush1.msra.mxu0 %v1761
    %1797 = vmatprep.subr.mxu0 0.0
    %1798 = vmatpush1.msra.mxu0 %v1762
    %1799 = vmatprep.subr.mxu0 0.0
    %1800 = vmatpush1.msra.mxu0 %v1763
    %1801 = vmatprep.subr.mxu0 0.0
    %1802 = vmatpush1.msra.mxu0 %v1764
    %1803 = vmatprep.subr.mxu0 0.0
    %1804 = vmatpush1.msra.mxu0 %v1765
    %1805 = vmatprep.subr.mxu0 0.0
    %1806 = vmatpush1.msra.mxu0 0.0
    %1807 = vmatprep.subr.mxu0 0.0
    %1808 = vmatpush1.msra.mxu0 0.0
    %1809 = vmatprep.subr.mxu0 0.0
    %1810 = vmatpush1.msra.mxu0 0.0
    %1811 = vmatprep.subr.mxu0 0.0
    %1812 = vmatpush1.msra.mxu0 0.0
    %1813 = vmatprep.subr.mxu0 0.0
    %1814 = vmatpush1.msra.mxu0 0.0
    %1815 = vmatprep.subr.mxu0 0.0
    %1816 = vmatpush1.msra.mxu0 0.0
    %1817 = vmatprep.subr.mxu0 0.0
    %1818 = vmatpush1.msra.mxu0 0.0
    %1819 = vmatprep.subr.mxu0 0.0
    %1820 = vmatpush1.msra.mxu0 0.0
    %1821 = vmatprep.subr.mxu0 0.0
    %1822 = vmatpush1.msra.mxu0 0.0
    %1823 = vmatprep.subr.mxu0 0.0
    %1824 = vmatpush1.msra.mxu0 0.0
    %1825 = vmatprep.subr.mxu0 0.0
    %1826 = vmatpush1.msra.mxu0 0.0
    %1827 = vmatprep.subr.mxu0 0.0
    %1828 = vmatpush1.msra.mxu0 0.0
    %1829 = vmatprep.subr.mxu0 0.0
    %1830 = vmatpush1.msra.mxu0 0.0
    %1831 = vmatprep.subr.mxu0 0.0
    %1832 = vmatpush1.msra.mxu0 0.0
    %1833 = vmatprep.subr.mxu0 0.0
    %1834 = vmatpush1.msra.mxu0 0.0
    %1835 = vmatprep.subr.mxu0 0.0
    %1836 = vmatpush1.msra.mxu0 0.0
    %1837 = vmatprep.mubr.f32.mxu0 0.0
    %1838 = vmatmul.mubr.f32.gmra.mrb[0].mxu0 %v1190
    %v1839 = vpop.f32.mrb[0].mxu0
    %v1840 = vadd.f32 %v1771, %v1839
    %v1841 = vpop.f32.mrb[0].mxu0
    %1842 = vmatprep.mubr.f32.mxu0 0.0
    %1843 = vmatmul.mubr.f32.gmra.mrb[0].mxu0 %v1270
    %v1844 = vpop.f32.mrb[0].mxu0
    %v1845 = vadd.f32 %v1771, %v1844
    %v1846 = vpop.f32.mrb[0].mxu0
    %1847 = vmatprep.mubr.f32.mxu0 0.0
    %1848 = vmatmul.mubr.f32.gmra.mrb[0].mxu0 %v1350
    %v1849 = vpop.f32.mrb[0].mxu0
    %v1850 = vadd.f32 %v1771, %v1849
    %v1851 = vpop.f32.mrb[0].mxu0
    %1852 = vmatprep.mubr.f32.mxu0 0.0
    %1853 = vmatmul.mubr.f32.gmra.mrb[0].mxu0 %v1430
    %v1854 = vpop.f32.mrb[0].mxu0
    %v1855 = vadd.f32 %v1771, %v1854
    %v1856 = vpop.f32.mrb[0].mxu0
    %1857 = vmatprep.mubr.f32.mxu0 0.0
    %1858 = vmatmul.mubr.f32.gmra.mrb[0].mxu0 %v1510
    %v1859 = vpop.f32.mrb[0].mxu0
    %v1860 = vadd.f32 %v1771, %v1859
    %v1861 = vpop.f32.mrb[0].mxu0
    %1862 = vmatprep.mubr.f32.mxu0 0.0
    %1863 = vmatmul.mubr.f32.gmra.mrb[0].mxu0 %v1590
    %v1864 = vpop.f32.mrb[0].mxu0
    %v1865 = vadd.f32 %v1771, %v1864
    %v1866 = vpop.f32.mrb[0].mxu0
    %1867 = vmatprep.mubr.f32.mxu0 0.0
    %1868 = vmatmul.mubr.f32.gmra.mrb[0].mxu0 %v1670
    %v1869 = vpop.f32.mrb[0].mxu0
    %v1870 = vadd.f32 %v1771, %v1869
    %v1871 = vpop.f32.mrb[0].mxu0
    %1872 = vmatprep.mubr.f32.mxu0 0.0
    %1873 = vmatmul.mubr.f32.gmra.mrb[0].mxu0 %v1749
    %v1874 = vpop.f32.mrb[0].mxu0
    %v1875 = vadd.f32 %v1771, %v1874
    %v1876 = vpop.f32.mrb[0].mxu0
    %1877 = vdwg.mxu0
    %1878 = vmax.xlane.f32.xlu0 %v1840
    %v1879 = vpop.xlane.xlu0 %1878
    %1880 = vmax.xlane.f32.xlu0 %v1845
    %v1881 = vpop.xlane.xlu0 %1880
    %1882 = vmax.xlane.f32.xlu0 %v1850
    %v1883 = vpop.xlane.xlu0 %1882
    %1884 = vmax.xlane.f32.xlu0 %v1855
    %v1885 = vpop.xlane.xlu0 %1884
    %1886 = vmax.xlane.f32.xlu0 %v1860
    %v1887 = vpop.xlane.xlu0 %1886
    %1888 = vmax.xlane.f32.xlu0 %v1865
    %v1889 = vpop.xlane.xlu0 %1888
    %1890 = vmax.xlane.f32.xlu0 %v1870
    %v1891 = vpop.xlane.xlu0 %1890
    %1892 = vmax.xlane.f32.xlu0 %v1875
    %v1893 = vpop.xlane.xlu0 %1892
    %v1894 = vsub.f32 %v1840, %v1879
    %v1895 = vsub.f32 %v1845, %v1881
    %v1896 = vsub.f32 %v1850, %v1883
    %v1897 = vsub.f32 %v1855, %v1885
    %v1898 = vsub.f32 %v1860, %v1887
    %v1899 = vsub.f32 %v1865, %v1889
    %v1900 = vsub.f32 %v1870, %v1891
    %v1901 = vsub.f32 %v1875, %v1893
    %v1902 = vmul.f32 %v1894, 1.442695
    %v1903 = vpow.pop %v1902
    %v1904 = vmul.f32 %v1895, 1.442695
    %v1905 = vpow.pop %v1904
    %v1906 = vmul.f32 %v1896, 1.442695
    %v1907 = vpow.pop %v1906
    %v1908 = vmul.f32 %v1897, 1.442695
    %v1909 = vpow.pop %v1908
    %v1910 = vmul.f32 %v1898, 1.442695
    %v1911 = vpow.pop %v1910
    %v1912 = vmul.f32 %v1899, 1.442695
    %v1913 = vpow.pop %v1912
    %v1914 = vmul.f32 %v1900, 1.442695
    %v1915 = vpow.pop %v1914
    %v1916 = vmul.f32 %v1901, 1.442695
    %v1917 = vpow.pop %v1916
    %1918 = vadd.xlane.f32.xlu0 %v1903
    %v1919 = vpop.xlane.xlu0 %1918
    %1920 = vadd.xlane.f32.xlu0 %v1905
    %v1921 = vpop.xlane.xlu0 %1920
    %1922 = vadd.xlane.f32.xlu0 %v1907
    %v1923 = vpop.xlane.xlu0 %1922
    %1924 = vadd.xlane.f32.xlu0 %v1909
    %v1925 = vpop.xlane.xlu0 %1924
    %1926 = vadd.xlane.f32.xlu0 %v1911
    %v1927 = vpop.xlane.xlu0 %1926
    %1928 = vadd.xlane.f32.xlu0 %v1913
    %v1929 = vpop.xlane.xlu0 %1928
    %1930 = vadd.xlane.f32.xlu0 %v1915
    %v1931 = vpop.xlane.xlu0 %1930
    %1932 = vadd.xlane.f32.xlu0 %v1917
    %v1933 = vpop.xlane.xlu0 %1932
    %v1934 = vlog2.pop %v1919
    %v1935 = vmul.f32 %v1934, 0.6931472
    %v1936 = vlog2.pop %v1921
    %v1937 = vmul.f32 %v1936, 0.6931472
    %v1938 = vlog2.pop %v1923
    %v1939 = vmul.f32 %v1938, 0.6931472
    %v1940 = vlog2.pop %v1925
    %v1941 = vmul.f32 %v1940, 0.6931472
    %v1942 = vlog2.pop %v1927
    %v1943 = vmul.f32 %v1942, 0.6931472
    %v1944 = vlog2.pop %v1929
    %v1945 = vmul.f32 %v1944, 0.6931472
    %v1946 = vlog2.pop %v1931
    %v1947 = vmul.f32 %v1946, 0.6931472
    %v1948 = vlog2.pop %v1933
    %v1949 = vmul.f32 %v1948, 0.6931472
    %v1950 = vadd.f32 %v1935, %v1879
    %v1951 = vadd.f32 %v1937, %v1881
    %v1952 = vadd.f32 %v1939, %v1883
    %v1953 = vadd.f32 %v1941, %v1885
    %v1954 = vadd.f32 %v1943, %v1887
    %v1955 = vadd.f32 %v1945, %v1889
    %v1956 = vadd.f32 %v1947, %v1891
    %v1957 = vadd.f32 %v1949, %v1893
    %v1958 = vsub.f32 %v1840, %v1950
    %v1959 = vsub.f32 %v1845, %v1951
    %v1960 = vsub.f32 %v1850, %v1952
    %v1961 = vsub.f32 %v1855, %v1953
    %v1962 = vsub.f32 %v1860, %v1954
    %v1963 = vsub.f32 %v1865, %v1955
    %v1964 = vsub.f32 %v1870, %v1956
    %v1965 = vsub.f32 %v1875, %v1957
    %1966 = vst [vmem:[#allocation8] sm:$0xff] %v1958
    %1967 = vst [vmem:[#allocation8 + $0x8] sm:$0xff] %v1959
    %1968 = vst [vmem:[#allocation8 + $0x10] sm:$0xff] %v1960
    %1969 = vst [vmem:[#allocation8 + $0x18] sm:$0xff] %v1961
    %1970 = vst [vmem:[#allocation8 + $0x20] sm:$0xff] %v1962
    %1971 = vst [vmem:[#allocation8 + $0x28] sm:$0xff] %v1963
    %1972 = vst [vmem:[#allocation8 + $0x30] sm:$0xff] %v1964
    %1973 = vst [vmem:[#allocation8 + $0x38] sm:$0xff] %v1965
    // Predicated region
    $region62: #{tpu_custom_call.1} parent=1 // pred_check
      _
    $region63: #{tpu_custom_call.1} parent=1 // pred_check_branch
      %1975 = sbr.rel (0) target = $region65
    $region64: #{tpu_custom_call.1} parent=1 // pred_region
      %s1977 = ssub.s32 128, 128
      %1978 = vsyncadd [#allocation4], %s1977
      %s1980 = sshll.u32 [#allocation7], 4
      %s1981 = int_to_ptr.vmem [resolvable:$true] %s1980
      %1983 = dma.vmem_to_hbm [thread:$0]  %s1981, 128, %s13, [#allocation4]
    $region65: #{tpu_custom_call.1} parent=1 // pred_fallthru
      _
    // Predicated region
    $region66: #{tpu_custom_call.1} parent=1 // pred_check
      _
    $region67: #{tpu_custom_call.1} parent=1 // pred_check_branch
      %1985 = sbr.rel (0) target = $region69
    $region68: #{tpu_custom_call.1} parent=1 // pred_region
      %s1987 = ssub.s32 1024, 1024
      %1988 = vsyncadd [#allocation9], %s1987
      %s1989 = sshll.u32 [#allocation8], 4
      %s1990 = int_to_ptr.vmem [resolvable:$true] %s1989
      %1995 = dma.vmem_to_hbm [thread:$0]  %s1990, 1024, %s14, [#allocation9], 128, 128, 8
    $region69: #{tpu_custom_call.1} parent=1 // pred_fallthru
      _
    // Predicated region
    $region70: #{tpu_custom_call.1} parent=1 // pred_check
      _
    $region71: #{tpu_custom_call.1} parent=1 // pred_check_branch
      %1997 = sbr.rel (0) target = $region73
    $region72: #{tpu_custom_call.1} parent=1 // pred_region
      %1998 = dma.done [#allocation4], 128
    $region73: #{tpu_custom_call.1} parent=1 // pred_fallthru
      _
    // Predicated region
    $region74: #{tpu_custom_call.1} parent=1 // pred_check
      _
    $region75: #{tpu_custom_call.1} parent=1 // pred_check_branch
      %2000 = sbr.rel (0) target = $region77
    $region76: #{tpu_custom_call.1} parent=1 // pred_region
      %2001 = dma.done [#allocation9], 1024
    $region77: #{tpu_custom_call.1} parent=1 // pred_fallthru
      _
    %2002 = vsyncpa [#allocation3], 1
    %2003 = vsyncpa [#allocation6], 1
    %2004 = vsyncpa [#allocation4], 1
    %2005 = vsyncpa [#allocation9], 1

</llo_original>
